<compile_context>
chip_gen: v7x
topology: tpu7x:2x2x1
jax: 0.10.0
libtpu: 0.0.40
codegen_flags: <defaults>
</compile_context>

<pallas_src>
import functools

import jax
import jax.numpy as jnp
from jax.experimental import pallas as pl
from jax.experimental.pallas import tpu as pltpu


def _round_up(a, b):
    return (a + b - 1) // b * b


def _cdiv(a, b):
    return (a + b - 1) // b


def _physical_vmem_bytes():
    """Per-TensorCore VMEM capacity; conservative 64 MiB (v7x) if unknown."""
    try:
        cap = getattr(pltpu.get_tpu_info(), "vmem_capacity_bytes", None)
        if cap:
            return int(cap)
    except Exception:
        # Hardware query unavailable (e.g. ahead-of-time trace): be conservative.
        pass
    return 64 << 20


def _mlp_kernel(x_ref, w1_ref, b1_ref, w2_ref, b2_ref, o_ref, *,
                dh_chunk, compute_dtype, act_dtype):
    """One (tm, Din) row tile: y = QuickGELU(x @ W1 + b1) @ W2 + b2."""
    tm = x_ref.shape[0]
    dh = w1_ref.shape[1]
    dout = w2_ref.shape[1]
    n_chunks = dh // dh_chunk  # wrapper guarantees divisibility

    # Cast the streamed tile to the MXU dtype inside VMEM (cheap VPU op, hides
    # under the MXU); avoids a separate HBM cast pass in the wrapper.
    x = x_ref[...].astype(compute_dtype)

    acc = jnp.zeros((tm, dout), jnp.float32)
    for c in range(n_chunks):  # static unroll; bounds the live (tm, dh_chunk) slab
        lo = c * dh_chunk
        # fc1 chunk on the MXU, f32 accumulation; bias add in f32.
        h = jnp.dot(x, w1_ref[:, pl.ds(lo, dh_chunk)],
                    preferred_element_type=jnp.float32)
        h = h + b1_ref[:, pl.ds(lo, dh_chunk)]
        # QuickGELU: z * sigmoid(1.702 z); the logistic goes to the EUP slot.
        h = h.astype(act_dtype)
        h = h * jax.nn.sigmoid(1.702 * h)
        # fc2 chunk, accumulated in f32.
        acc = acc + jnp.dot(h.astype(compute_dtype),
                            w2_ref[pl.ds(lo, dh_chunk), :],
                            preferred_element_type=jnp.float32)
    o_ref[...] = (acc + b2_ref[...]).astype(o_ref.dtype)


def mlp_pallas(x, w1, b1, w2, b2, *, tm=512, dh_chunk=512,
               compute_dtype=jnp.bfloat16, act_dtype=jnp.bfloat16,
               out_dtype=None):
    """x: (M, Din); w1: (Din, Dh); b1: (1, Dh)/(Dh,); w2: (Dh, Dout); b2: (1, Dout)/(Dout,).

    On v5e pass act_dtype=jnp.float32 (no bf16 VPU/EUP there).
    """
    M, Din = x.shape
    Dh = w1.shape[1]
    Dout = w2.shape[1]
    out_dtype = jnp.dtype(x.dtype if out_dtype is None else out_dtype)

    xsz = jnp.dtype(x.dtype).itemsize
    osz = jnp.dtype(out_dtype).itemsize
    csz = jnp.dtype(compute_dtype).itemsize
    asz = jnp.dtype(act_dtype).itemsize

    # Hidden-dim chunk: must be a multiple of 128 lanes and divide Dh; else
    # fall back to a single monolithic chunk.
    if not (dh_chunk and Dh % dh_chunk == 0 and dh_chunk % 128 == 0
            and dh_chunk < Dh):
        dh_chunk = Dh

    # Row tile: multiple of the sublane packing of the streamed dtypes; capped
    # so the row grid has >= 2 steps whenever M allows (both v7x TensorCores
    # get work), never larger than the (rounded-up) problem.
    sub = max(8, 32 // min(xsz, osz))
    tm_req = _round_up(max(tm, sub), sub)
    if M >= 2 * sub:
        tm_eff = min(tm_req, _round_up(_cdiv(M, 2), sub))
    else:
        tm_eff = _round_up(M, sub)

    # Weights as MXU operands (in a real model these would already be stored
    # in bf16); biases stay f32 and are added to the f32 accumulators in-kernel.
    w1c = w1.astype(compute_dtype)
    w2c = w2.astype(compute_dtype)
    b1c = b1.astype(jnp.float32).reshape(1, Dh)
    b2c = b2.astype(jnp.float32).reshape(1, Dout)

    # VMEM budget: resident weights/biases (2x: default pipeline allocation is
    # double-buffered even though the constant index map means they are only
    # DMA'd once), double-buffered x/out row tiles, in-kernel intermediates.
    weight_bytes = (Din * Dh + Dh * Dout) * csz + (Dh + Dout) * 4
    cap = _physical_vmem_bytes()

    def vmem_est(tm_):
        stream = 2 * tm_ * Din * xsz + 2 * tm_ * Dout * osz
        interm = tm_ * (Din * csz + dh_chunk * (4 + asz + csz) + Dout * 4)
        return 2 * weight_bytes + stream + interm

    # Shrink the row tile if a large DiSAT config would blow past physical
    # VMEM (matters on v7x with 64 MiB per TensorCore).
    while tm_eff > sub and int(1.3 * vmem_est(tm_eff)) + (4 << 20) > cap:
        tm_eff = max(sub, _round_up(tm_eff // 2, sub))

    vmem_limit = int(min(cap - (2 << 20),
                         max(32 << 20, int(1.3 * vmem_est(tm_eff)) + (4 << 20))))

    grid = (_cdiv(M, tm_eff),)

    cost = pl.CostEstimate(
        flops=2 * M * (Din * Dh + Dh * Dout),
        transcendentals=M * Dh,
        bytes_accessed=M * Din * xsz + weight_bytes + M * Dout * osz,
    )

    kernel = functools.partial(_mlp_kernel, dh_chunk=dh_chunk,
                               compute_dtype=compute_dtype, act_dtype=act_dtype)

    call = pl.pallas_call(
        kernel,
        out_shape=jax.ShapeDtypeStruct((M, Dout), out_dtype),
        grid_spec=pltpu.PrefetchScalarGridSpec(
            num_scalar_prefetch=0,
            grid=grid,
            in_specs=[
                pl.BlockSpec((tm_eff, Din), lambda i: (i, 0)),  # x row tile (native dtype)
                pl.BlockSpec((Din, Dh), lambda i: (0, 0)),      # W1, VMEM-resident
                pl.BlockSpec((1, Dh), lambda i: (0, 0)),        # b1 (f32)
                pl.BlockSpec((Dh, Dout), lambda i: (0, 0)),     # W2, VMEM-resident
                pl.BlockSpec((1, Dout), lambda i: (0, 0)),      # b2 (f32)
            ],
            out_specs=pl.BlockSpec((tm_eff, Dout), lambda i: (i, 0)),
        ),
        compiler_params=pltpu.CompilerParams(
            dimension_semantics=("parallel",),
            vmem_limit_bytes=vmem_limit,
        ),
        cost_estimate=cost,
    )
    return call(x, w1c, b1c, w2c, b2c)


def mlp_reference(x, w1, b1, w2, b2):
    h = x @ w1 + b1
    h = h * jax.nn.sigmoid(1.702 * h)
    return h @ w2 + b2


if __name__ == "__main__":
    # DiSAT 'small' config: embed_dim=256, mlp_ratio=4 -> hidden=1024.
    # Small token count: B=2, S=8.  embed_dim multiple of 128 -> lane-dense out.
    B, S = 2, 8
    in_features, hidden_features, out_features = 256, 1024, 256

    key = jax.random.PRNGKey(0)
    kx, kw1, kb1, kw2, kb2 = jax.random.split(key, 5)

    x_bsc = jax.random.normal(kx, (B, S, in_features), dtype=jnp.float32)
    w1 = jax.random.normal(kw1, (in_features, hidden_features), jnp.float32) * 0.05
    b1 = jax.random.normal(kb1, (1, hidden_features), jnp.float32) * 0.05
    w2 = jax.random.normal(kw2, (hidden_features, out_features), jnp.float32) * 0.05
    b2 = jax.random.normal(kb2, (1, out_features), jnp.float32) * 0.05

    # Flatten tokens to (M, in_features); reshape back after the kernel.
    x2d = x_bsc.reshape(B * S, in_features)
    out2d = mlp_pallas(x2d, w1, b1, w2, b2)
    out = out2d.reshape(B, S, out_features)
    jax.block_until_ready(out)

    ref2d = mlp_reference(x2d, w1, b1, w2, b2)
    ref = ref2d.reshape(B, S, out_features)
    err = float(jnp.max(jnp.abs(out - ref)))
    assert jnp.allclose(out, ref, atol=8e-2, rtol=8e-2), \
        f"mismatch vs reference (max abs err {err})"

    # Ragged row count (M=10 is not a multiple of the row tile): no wrapper
    # padding; Pallas masks the overhanging rows of the last block.
    out_odd = mlp_pallas(x2d[:10], w1, b1, w2, b2)
    jax.block_until_ready(out_odd)
    ref_odd = mlp_reference(x2d[:10], w1, b1, w2, b2)
    assert out_odd.shape == (10, out_features)
    assert jnp.allclose(out_odd, ref_odd, atol=8e-2, rtol=8e-2), \
        "mismatch vs reference on ragged remainder"

    # Optional bf16 output (when the surrounding DiT block runs bf16): halves
    # output write traffic on v6e/v7x.
    out_bf16 = mlp_pallas(x2d, w1, b1, w2, b2, out_dtype=jnp.bfloat16)
    jax.block_until_ready(out_bf16)
    assert out_bf16.dtype == jnp.bfloat16
    assert jnp.allclose(out_bf16.astype(jnp.float32), ref2d,
                        atol=1.5e-1, rtol=1.5e-1), "mismatch on bf16 output path"

    print("KERNEL_OK")
</pallas_src>

<mosaic_0001>
module attributes {stable_mosaic.version = 11 : i64} {
  func.func @_mlp_kernel(%arg0: i32, %arg1: memref<8x256xf32, #tpu.memory_space<vmem>>, %arg2: memref<256x1024xbf16, #tpu.memory_space<vmem>>, %arg3: memref<1x1024xf32, #tpu.memory_space<vmem>>, %arg4: memref<1024x256xbf16, #tpu.memory_space<vmem>>, %arg5: memref<1x256xf32, #tpu.memory_space<vmem>>, %arg6: memref<8x256xf32, #tpu.memory_space<vmem>>) attributes {dimension_semantics = [#tpu.dimension_semantics<parallel>], iteration_bounds = array<i64: 2>, scalar_prefetch = 0 : i64, scratch_operands = 0 : i64, tpu.core_type = #tpu.core_type<tc>, window_params = [{transform_indices = @transform_0, window_bounds = array<i64: 8, 256>}, {pipeline_mode = #tpu.pipeline_mode<synchronous>, transform_indices = @transform_1, window_bounds = array<i64: 256, 1024>}, {pipeline_mode = #tpu.pipeline_mode<synchronous>, transform_indices = @transform_2, window_bounds = array<i64: 1, 1024>}, {pipeline_mode = #tpu.pipeline_mode<synchronous>, transform_indices = @transform_3, window_bounds = array<i64: 1024, 256>}, {pipeline_mode = #tpu.pipeline_mode<synchronous>, transform_indices = @transform_4, window_bounds = array<i64: 1, 256>}, {transform_indices = @transform_5, window_bounds = array<i64: 8, 256>}]} {
    %c0 = arith.constant 0 : index
    %c0_0 = arith.constant 0 : index
    %0 = vector.load %arg1[%c0, %c0_0] : memref<8x256xf32, #tpu.memory_space<vmem>>, vector<8x256xf32>
    %1 = arith.truncf %0 : vector<8x256xf32> to vector<8x256xbf16>
    %cst = arith.constant 0.000000e+00 : f32
    %2 = vector.broadcast %cst : f32 to vector<8x256xf32>
    %c0_1 = arith.constant 0 : index
    %c0_2 = arith.constant 0 : index
    %3 = vector.load %arg2[%c0_1, %c0_2] : memref<256x1024xbf16, #tpu.memory_space<vmem>>, vector<256x512xbf16>
    %cst_3 = arith.constant dense<0.000000e+00> : vector<8x512xf32>
    %4 = tpu.matmul %1, %3, %cst_3 {dimension_numbers = #tpu.dot_dimension_numbers<[1], [0], [0], [1], [0, 0, 1, 1], [], []>} : vector<8x256xbf16>, vector<256x512xbf16>, vector<8x512xf32> -> vector<8x512xf32>
    %c0_4 = arith.constant 0 : index
    %c0_5 = arith.constant 0 : index
    %5 = vector.load %arg3[%c0_4, %c0_5] : memref<1x1024xf32, #tpu.memory_space<vmem>>, vector<1x512xf32>
    %6 = vector.broadcast %5 : vector<1x512xf32> to vector<8x512xf32>
    %7 = arith.addf %4, %6 : vector<8x512xf32>
    %8 = arith.truncf %7 : vector<8x512xf32> to vector<8x512xbf16>
    %cst_6 = arith.constant 1.703130e+00 : bf16
    %9 = vector.broadcast %cst_6 : bf16 to vector<8x512xbf16>
    %10 = arith.mulf %9, %8 : vector<8x512xbf16>
    %11 = arith.negf %10 : vector<8x512xbf16>
    %12 = math.exp %11 : vector<8x512xbf16>
    %cst_7 = arith.constant 1.000000e+00 : bf16
    %13 = vector.broadcast %cst_7 : bf16 to vector<8x512xbf16>
    %14 = arith.addf %13, %12 : vector<8x512xbf16>
    %15 = arith.divf %13, %14 : vector<8x512xbf16>
    %16 = arith.mulf %8, %15 : vector<8x512xbf16>
    %c0_8 = arith.constant 0 : index
    %c0_9 = arith.constant 0 : index
    %17 = vector.load %arg4[%c0_8, %c0_9] : memref<1024x256xbf16, #tpu.memory_space<vmem>>, vector<512x256xbf16>
    %cst_10 = arith.constant dense<0.000000e+00> : vector<8x256xf32>
    %18 = tpu.matmul %16, %17, %cst_10 {dimension_numbers = #tpu.dot_dimension_numbers<[1], [0], [0], [1], [0, 0, 1, 1], [], []>} : vector<8x512xbf16>, vector<512x256xbf16>, vector<8x256xf32> -> vector<8x256xf32>
    %19 = arith.addf %2, %18 : vector<8x256xf32>
    %c0_11 = arith.constant 0 : index
    %c512 = arith.constant 512 : index
    %20 = vector.load %arg2[%c0_11, %c512] : memref<256x1024xbf16, #tpu.memory_space<vmem>>, vector<256x512xbf16>
    %cst_12 = arith.constant dense<0.000000e+00> : vector<8x512xf32>
    %21 = tpu.matmul %1, %20, %cst_12 {dimension_numbers = #tpu.dot_dimension_numbers<[1], [0], [0], [1], [0, 0, 1, 1], [], []>} : vector<8x256xbf16>, vector<256x512xbf16>, vector<8x512xf32> -> vector<8x512xf32>
    %c0_13 = arith.constant 0 : index
    %c512_14 = arith.constant 512 : index
    %22 = vector.load %arg3[%c0_13, %c512_14] : memref<1x1024xf32, #tpu.memory_space<vmem>>, vector<1x512xf32>
    %23 = vector.broadcast %22 : vector<1x512xf32> to vector<8x512xf32>
    %24 = arith.addf %21, %23 : vector<8x512xf32>
    %25 = arith.truncf %24 : vector<8x512xf32> to vector<8x512xbf16>
    %cst_15 = arith.constant 1.703130e+00 : bf16
    %26 = vector.broadcast %cst_15 : bf16 to vector<8x512xbf16>
    %27 = arith.mulf %26, %25 : vector<8x512xbf16>
    %28 = arith.negf %27 : vector<8x512xbf16>
    %29 = math.exp %28 : vector<8x512xbf16>
    %cst_16 = arith.constant 1.000000e+00 : bf16
    %30 = vector.broadcast %cst_16 : bf16 to vector<8x512xbf16>
    %31 = arith.addf %30, %29 : vector<8x512xbf16>
    %32 = arith.divf %30, %31 : vector<8x512xbf16>
    %33 = arith.mulf %25, %32 : vector<8x512xbf16>
    %c512_17 = arith.constant 512 : index
    %c0_18 = arith.constant 0 : index
    %34 = vector.load %arg4[%c512_17, %c0_18] : memref<1024x256xbf16, #tpu.memory_space<vmem>>, vector<512x256xbf16>
    %cst_19 = arith.constant dense<0.000000e+00> : vector<8x256xf32>
    %35 = tpu.matmul %33, %34, %cst_19 {dimension_numbers = #tpu.dot_dimension_numbers<[1], [0], [0], [1], [0, 0, 1, 1], [], []>} : vector<8x512xbf16>, vector<512x256xbf16>, vector<8x256xf32> -> vector<8x256xf32>
    %36 = arith.addf %19, %35 : vector<8x256xf32>
    %c0_20 = arith.constant 0 : index
    %c0_21 = arith.constant 0 : index
    %37 = vector.load %arg5[%c0_20, %c0_21] : memref<1x256xf32, #tpu.memory_space<vmem>>, vector<1x256xf32>
    %38 = vector.broadcast %37 : vector<1x256xf32> to vector<8x256xf32>
    %39 = arith.addf %36, %38 : vector<8x256xf32>
    %c0_22 = arith.constant 0 : index
    %c0_23 = arith.constant 0 : index
    %40 = vector.load %arg6[%c0_22, %c0_23] : memref<8x256xf32, #tpu.memory_space<vmem>>, vector<8x256xf32>
    tpu.vector_store %arg6[%c0_22, %c0_23], %39 {strides = array<i32>} : memref<8x256xf32, #tpu.memory_space<vmem>>, vector<8x256xf32>,
    return
  }
  func.func @transform_0(%arg0: i32) -> (i32, i32) {
    %c0_i32 = arith.constant 0 : i32
    %c0_i32_0 = arith.constant 0 : i32
    return %arg0, %c0_i32 : i32, i32
  }
  func.func @transform_1(%arg0: i32) -> (i32, i32) {
    %c0_i32 = arith.constant 0 : i32
    %c0_i32_0 = arith.constant 0 : i32
    %c0_i32_1 = arith.constant 0 : i32
    return %c0_i32, %c0_i32_0 : i32, i32
  }
  func.func @transform_2(%arg0: i32) -> (i32, i32) {
    %c0_i32 = arith.constant 0 : i32
    %c0_i32_0 = arith.constant 0 : i32
    %c0_i32_1 = arith.constant 0 : i32
    return %c0_i32, %c0_i32_0 : i32, i32
  }
  func.func @transform_3(%arg0: i32) -> (i32, i32) {
    %c0_i32 = arith.constant 0 : i32
    %c0_i32_0 = arith.constant 0 : i32
    %c0_i32_1 = arith.constant 0 : i32
    return %c0_i32, %c0_i32_0 : i32, i32
  }
  func.func @transform_4(%arg0: i32) -> (i32, i32) {
    %c0_i32 = arith.constant 0 : i32
    %c0_i32_0 = arith.constant 0 : i32
    %c0_i32_1 = arith.constant 0 : i32
    return %c0_i32, %c0_i32_0 : i32, i32
  }
  func.func @transform_5(%arg0: i32) -> (i32, i32) {
    %c0_i32 = arith.constant 0 : i32
    %c0_i32_0 = arith.constant 0 : i32
    return %arg0, %c0_i32 : i32, i32
  }
}

</mosaic_0001>

<llo_original>
// kernel: tpu_custom_call.1
$region0: #{tpu_custom_call.1}
  #allocation0 [shape = 'u32[]', space=smem, size = 0x4, offset = 0x4, fixed_abs, tag = 'smem constant byte address 0x4 - core index']
  #allocation1 [shape = 'u32[144,128]{1,0:T(1,128)}', space=vmem, size = 0x12000, scoped, tag = 'internal scratch']
  %s0 = inlined_call_operand.hbm [shape: f32[16,256], index: 0, kind: input, shape index: {}]
  %s1 = inlined_call_operand.hbm [shape: bf16[256,1024], index: 1, kind: input, shape index: {}]
  %s2 = inlined_call_operand.hbm [shape: f32[1,1024], index: 2, kind: input, shape index: {}]
  %s3 = inlined_call_operand.hbm [shape: bf16[1024,256], index: 3, kind: input, shape index: {}]
  %s4 = inlined_call_operand.vmem [shape: f32[1,256], index: 4, kind: input, shape index: {}]
  %s5 = inlined_call_operand.hbm [shape: f32[16,256], index: 5, kind: output, shape index: {}]
  %s6 = sld [smem:[#allocation0]]
  $region69: #{tpu_custom_call.1} parent=0
    _
  %s8 = ssub.s32 1, %s6
  %s9 = scalar_select 0, %s8, %s6
  $region1: #{tpu_custom_call.1} parent=0
    #allocation2 [shape = 'u8[16384]{0}', space=vmem, size = 0x4000, scoped, tag = 'input window, operand 0']
    #allocation3 [shape = 's32[2]{0}', space=sflag, size = 0x8, scoped, tag = 'scoped memory for tpu_custom_call.1']
    #allocation4 [shape = 's32[2]{0}', space=sflag, size = 0x8, scoped, tag = 'scoped memory for tpu_custom_call.1']
    #allocation5 [shape = 'u8[524288]{0}', space=vmem, size = 0x80000, scoped, tag = 'input window, operand 1, single buffered']
    #allocation6 [shape = 's32[1]{0}', space=sflag, size = 0x4, scoped, tag = 'scoped memory for tpu_custom_call.1']
    #allocation7 [shape = 'u8[4096]{0}', space=vmem, size = 0x1000, scoped, tag = 'input window, operand 2, single buffered']
    #allocation8 [shape = 'u8[524288]{0}', space=vmem, size = 0x80000, scoped, tag = 'input window, operand 3, single buffered']
    #allocation9 [shape = 's32[1]{0}', space=sflag, size = 0x4, scoped, tag = 'scoped memory for tpu_custom_call.1']
    #allocation10 [shape = 'u8[16384]{0}', space=vmem, size = 0x4000, scoped, tag = 'output window, operand 0']
    %10 = vsyncpa [#allocation3], 0
    %s11 = scalar_lea.sflag [#allocation3], 1
    %12 = vsyncpa %s11, 0
    %13 = vsyncpa [#allocation6], 0
    %14 = vsyncpa [#allocation9], 0
    %15 = vsyncpa [#allocation4], 0
    %s16 = scalar_lea.sflag [#allocation4], 1
    %17 = vsyncpa %s16, 0
    loop: start=0, step=1, limit=4
    $region2: #{tpu_custom_call.1} parent=1 // loop_pre_header
      _
    $region3: #{tpu_custom_call.1} parent=1 // loop_header
      %s19 = sphi 0, %s23
      %p20 = scmp.ge.s32.totalorder %s19, 4
      %s29 = sphi 0, %s31
      %s32 = sphi 0, %s29
      %s33 = sphi 0, %s32
      %s49 = sphi 0, %s33
      %s53 = sphi 0, %s53
      %s55 = sphi 0, %s53
      %s56 = sphi 0, %s55
      %s70 = sphi 0, %s56
      %s74 = sphi 0, %s74
      %s76 = sphi 0, %s74
      %s77 = sphi 0, %s76
      %s91 = sphi 0, %s77
      %s95 = sphi 0, %s95
      %s97 = sphi 0, %s95
      %s98 = sphi 0, %s97
      %s112 = sphi 0, %s98
      %s116 = sphi 0, %s116
      %s118 = sphi 0, %s116
      %s119 = sphi 0, %s118
      %s133 = sphi 0, %s119
      %s139 = sphi 0, %s141
      %s142 = sphi 0, %s139
      %s143 = sphi 0, %s142
      %s159 = sphi 0, %s143
    $region4: #{tpu_custom_call.1} parent=1 // loop_header_branch
      %22 = sbr.rel (%p20) target = $region8
    $region5: #{tpu_custom_call.1} parent=1 // loop_body
      %s24 = ssub.s32 %s19, 1
      %s25 = ssub.s32 %s19, 2
      %s26 = sadd.s32 %s19, 1
      %s27 = ssub.s32 %s19, %s26
      %p28 = scmp.eq.s32.totalorder %s27, 0
      %s30 = sadd.s32 %s29, 1
      %s31 = scalar_select %p28, %s29, %s30
      %p34 = pneg %p28
      %p35 = scmp.eq.s32.totalorder %s19, 1
      %p36 = por %p34, %p35
      %p37 = scmp.ne.s32.totalorder %s29, %s32
      %p38 = scmp.eq.s32.totalorder %s19, 0
      %p39 = por %p37, %p38
      %p40 = scmp.ne.s32.totalorder %s29, %s32
      %p41 = scmp.eq.s32.totalorder %s24, 1
      %p42 = por %p40, %p41
      %p43 = scmp.ne.s32.totalorder %s32, %s33
      %p44 = scmp.eq.s32.totalorder %s24, 0
      %p45 = por %p43, %p44
      %p46 = scmp.ne.s32.totalorder %s32, %s33
      %p47 = scmp.eq.s32.totalorder %s25, 1
      %p48 = por %p46, %p47
      %p50 = scmp.ne.s32.totalorder %s33, %s49
      %p51 = scmp.eq.s32.totalorder %s25, 0
      %p52 = por %p50, %p51
      %s54 = sadd.s32 %s53, 1
      %p57 = scmp.eq.s32.totalorder %s19, 1
      %p58 = scmp.ne.s32.totalorder %s53, %s55
      %p59 = scmp.eq.s32.totalorder %s19, 0
      %p60 = por %p58, %p59
      %p61 = scmp.ne.s32.totalorder %s53, %s55
      %p62 = scmp.eq.s32.totalorder %s24, 1
      %p63 = por %p61, %p62
      %p64 = scmp.ne.s32.totalorder %s55, %s56
      %p65 = scmp.eq.s32.totalorder %s24, 0
      %p66 = por %p64, %p65
      %p67 = scmp.ne.s32.totalorder %s55, %s56
      %p68 = scmp.eq.s32.totalorder %s25, 1
      %p69 = por %p67, %p68
      %p71 = scmp.ne.s32.totalorder %s56, %s70
      %p72 = scmp.eq.s32.totalorder %s25, 0
      %p73 = por %p71, %p72
      %s75 = sadd.s32 %s74, 1
      %p78 = scmp.eq.s32.totalorder %s19, 1
      %p79 = scmp.ne.s32.totalorder %s74, %s76
      %p80 = scmp.eq.s32.totalorder %s19, 0
      %p81 = por %p79, %p80
      %p82 = scmp.ne.s32.totalorder %s74, %s76
      %p83 = scmp.eq.s32.totalorder %s24, 1
      %p84 = por %p82, %p83
      %p85 = scmp.ne.s32.totalorder %s76, %s77
      %p86 = scmp.eq.s32.totalorder %s24, 0
      %p87 = por %p85, %p86
      %p88 = scmp.ne.s32.totalorder %s76, %s77
      %p89 = scmp.eq.s32.totalorder %s25, 1
      %p90 = por %p88, %p89
      %p92 = scmp.ne.s32.totalorder %s77, %s91
      %p93 = scmp.eq.s32.totalorder %s25, 0
      %p94 = por %p92, %p93
      %s96 = sadd.s32 %s95, 1
      %p99 = scmp.eq.s32.totalorder %s19, 1
      %p100 = scmp.ne.s32.totalorder %s95, %s97
      %p101 = scmp.eq.s32.totalorder %s19, 0
      %p102 = por %p100, %p101
      %p103 = scmp.ne.s32.totalorder %s95, %s97
      %p104 = scmp.eq.s32.totalorder %s24, 1
      %p105 = por %p103, %p104
      %p106 = scmp.ne.s32.totalorder %s97, %s98
      %p107 = scmp.eq.s32.totalorder %s24, 0
      %p108 = por %p106, %p107
      %p109 = scmp.ne.s32.totalorder %s97, %s98
      %p110 = scmp.eq.s32.totalorder %s25, 1
      %p111 = por %p109, %p110
      %p113 = scmp.ne.s32.totalorder %s98, %s112
      %p114 = scmp.eq.s32.totalorder %s25, 0
      %p115 = por %p113, %p114
      %s117 = sadd.s32 %s116, 1
      %p120 = scmp.eq.s32.totalorder %s19, 1
      %p121 = scmp.ne.s32.totalorder %s116, %s118
      %p122 = scmp.eq.s32.totalorder %s19, 0
      %p123 = por %p121, %p122
      %p124 = scmp.ne.s32.totalorder %s116, %s118
      %p125 = scmp.eq.s32.totalorder %s24, 1
      %p126 = por %p124, %p125
      %p127 = scmp.ne.s32.totalorder %s118, %s119
      %p128 = scmp.eq.s32.totalorder %s24, 0
      %p129 = por %p127, %p128
      %p130 = scmp.ne.s32.totalorder %s118, %s119
      %p131 = scmp.eq.s32.totalorder %s25, 1
      %p132 = por %p130, %p131
      %p134 = scmp.ne.s32.totalorder %s119, %s133
      %p135 = scmp.eq.s32.totalorder %s25, 0
      %p136 = por %p134, %p135
      %s137 = ssub.s32 %s19, %s26
      %p138 = scmp.eq.s32.totalorder %s137, 0
      %s140 = sadd.s32 %s139, 1
      %s141 = scalar_select %p138, %s139, %s140
      %p144 = pneg %p138
      %p145 = scmp.eq.s32.totalorder %s19, 1
      %p146 = por %p144, %p145
      %p147 = scmp.ne.s32.totalorder %s139, %s142
      %p148 = scmp.eq.s32.totalorder %s19, 0
      %p149 = por %p147, %p148
      %p150 = scmp.ne.s32.totalorder %s139, %s142
      %p151 = scmp.eq.s32.totalorder %s24, 1
      %p152 = por %p150, %p151
      %p153 = scmp.ne.s32.totalorder %s142, %s143
      %p154 = scmp.eq.s32.totalorder %s24, 0
      %p155 = por %p153, %p154
      %p156 = scmp.ne.s32.totalorder %s142, %s143
      %p157 = scmp.eq.s32.totalorder %s25, 1
      %p158 = por %p156, %p157
      %p160 = scmp.ne.s32.totalorder %s143, %s159
      %p161 = scmp.eq.s32.totalorder %s25, 0
      %p162 = por %p160, %p161
      %p163 = scmp.le.s32.totalorder 1, %s19
      %p164 = scmp.lt.s32.totalorder %s19, 3
      %p165 = pnand %p163, %p164
      %p166 = pneg %p165
      // Predicated region
      $region9: #{tpu_custom_call.1} parent=5 // pred_check
        _
      $region10: #{tpu_custom_call.1} parent=5 // pred_check_branch
        %168 = sbr.rel (%p165) target = $region12
      $region11: #{tpu_custom_call.1} parent=5 // pred_region
        %s169 = ssub.s32 %s19, 1
        // Predicated region
        $region13: #{tpu_custom_call.1} parent=11 // pred_check
          %p170 = pneg %p66
        $region14: #{tpu_custom_call.1} parent=11 // pred_check_branch
          %172 = sbr.rel (%p170) target = $region16
        $region15: #{tpu_custom_call.1} parent=11 // pred_region
          %s174 = ssub.s32 16384, 16384
          %175 = vsyncadd [#allocation6], %s174
          %s176 = sshll.u32 [#allocation5], 4
          %s177 = int_to_ptr.vmem [resolvable:$true] %s176
          %182 = dma.hbm_to_vmem [thread:$0]  %s1, 16384, %s177, [#allocation6], 512, 512, 32
        $region16: #{tpu_custom_call.1} parent=11 // pred_fallthru
          _
        // Predicated region
        $region17: #{tpu_custom_call.1} parent=11 // pred_check
          %p183 = pneg %p87
        $region18: #{tpu_custom_call.1} parent=11 // pred_check_branch
          %185 = sbr.rel (%p183) target = $region20
        $region19: #{tpu_custom_call.1} parent=11 // pred_region
          %s187 = ssub.s32 128, 128
          %188 = vsyncadd [#allocation6], %s187
          %s190 = sshll.u32 [#allocation7], 4
          %s191 = int_to_ptr.vmem [resolvable:$true] %s190
          %193 = dma.hbm_to_vmem [thread:$0]  %s2, 128, %s191, [#allocation6]
        $region20: #{tpu_custom_call.1} parent=11 // pred_fallthru
          _
        // Predicated region
        $region21: #{tpu_custom_call.1} parent=11 // pred_check
          %p194 = pneg %p108
        $region22: #{tpu_custom_call.1} parent=11 // pred_check_branch
          %196 = sbr.rel (%p194) target = $region24
        $region23: #{tpu_custom_call.1} parent=11 // pred_region
          %s198 = ssub.s32 16384, 16384
          %199 = vsyncadd [#allocation9], %s198
          %s200 = sshll.u32 [#allocation8], 4
          %s201 = int_to_ptr.vmem [resolvable:$true] %s200
          %206 = dma.hbm_to_vmem [thread:$0]  %s3, 16384, %s201, [#allocation9], 128, 128, 8
        $region24: #{tpu_custom_call.1} parent=11 // pred_fallthru
          _
        // Predicated region
        $region25: #{tpu_custom_call.1} parent=11 // pred_check
          %p207 = pneg %p129
        $region26: #{tpu_custom_call.1} parent=11 // pred_check_branch
          %209 = sbr.rel (%p207) target = $region28
        $region27: #{tpu_custom_call.1} parent=11 // pred_region
          _
        $region28: #{tpu_custom_call.1} parent=11 // pred_fallthru
          _
      $region12: #{tpu_custom_call.1} parent=5 // pred_fallthru
        _
      %p210 = scmp.lt.s32.totalorder %s19, 2
      // Predicated region
      $region29: #{tpu_custom_call.1} parent=5 // pred_check
        %p211 = pneg %p210
      $region30: #{tpu_custom_call.1} parent=5 // pred_check_branch
        %213 = sbr.rel (%p211) target = $region32
      $region31: #{tpu_custom_call.1} parent=5 // pred_region
        // Predicated region
        $region33: #{tpu_custom_call.1} parent=31 // pred_check
          %p214 = pneg %p39
        $region34: #{tpu_custom_call.1} parent=31 // pred_check_branch
          %216 = sbr.rel (%p214) target = $region36
        $region35: #{tpu_custom_call.1} parent=31 // pred_region
          %s217 = sand.u32 %s29, 1
          %s218 = scalar_lea.sflag [#allocation3], %s217
          %s219 = sand.u32 %s29, 1
          %s220 = smul.addr %s219, 16
          %s221 = scalar_lea.vmem [#allocation2], %s220
          %s223 = ssub.s32 256, 256
          %224 = vsyncadd %s218, %s223
          %s225 = smul.addr %s19, 2
          %s226 = smul.addr %s225, 128
          %s227 = scalar_lea.hbm %s0, %s226
          %s229 = sshll.u32 %s221, 4
          %s230 = int_to_ptr.vmem [resolvable:$true] %s229
          %232 = dma.hbm_to_vmem [thread:$0]  %s227, 256, %s230, %s218
        $region36: #{tpu_custom_call.1} parent=31 // pred_fallthru
          _
      $region32: #{tpu_custom_call.1} parent=5 // pred_fallthru
        _
      %p233 = scmp.le.s32.totalorder 1, %s19
      %p234 = scmp.lt.s32.totalorder %s19, 3
      %p235 = pnand %p233, %p234
      %p236 = pneg %p235
      // Predicated region
      $region37: #{tpu_custom_call.1} parent=5 // pred_check
        _
      $region38: #{tpu_custom_call.1} parent=5 // pred_check_branch
        %238 = sbr.rel (%p235) target = $region40
      $region39: #{tpu_custom_call.1} parent=5 // pred_region
        %s239 = ssub.s32 %s19, 1
        %s240 = sand.u32 %s32, 1
        %s241 = scalar_lea.sflag [#allocation3], %s240
        %s242 = sand.u32 %s32, 1
        %s243 = smul.addr %s242, 16
        %s244 = scalar_lea.vmem [#allocation2], %s243
        // Predicated region
        $region41: #{tpu_custom_call.1} parent=39 // pred_check
          %p245 = pneg %p45
        $region42: #{tpu_custom_call.1} parent=39 // pred_check_branch
          %247 = sbr.rel (%p245) target = $region44
        $region43: #{tpu_custom_call.1} parent=39 // pred_region
          %248 = dma.done %s241, 256
        $region44: #{tpu_custom_call.1} parent=39 // pred_fallthru
          _
        // Predicated region
        $region45: #{tpu_custom_call.1} parent=39 // pred_check
          %p249 = pneg %p66
        $region46: #{tpu_custom_call.1} parent=39 // pred_check_branch
          %251 = sbr.rel (%p249) target = $region48
        $region47: #{tpu_custom_call.1} parent=39 // pred_region
          %252 = dma.done [#allocation6], 16384
        $region48: #{tpu_custom_call.1} parent=39 // pred_fallthru
          _
        // Predicated region
        $region49: #{tpu_custom_call.1} parent=39 // pred_check
          %p253 = pneg %p87
        $region50: #{tpu_custom_call.1} parent=39 // pred_check_branch
          %255 = sbr.rel (%p253) target = $region52
        $region51: #{tpu_custom_call.1} parent=39 // pred_region
          %256 = dma.done [#allocation6], 128
        $region52: #{tpu_custom_call.1} parent=39 // pred_fallthru
          _
        // Predicated region
        $region53: #{tpu_custom_call.1} parent=39 // pred_check
          %p257 = pneg %p108
        $region54: #{tpu_custom_call.1} parent=39 // pred_check_branch
          %259 = sbr.rel (%p257) target = $region56
        $region55: #{tpu_custom_call.1} parent=39 // pred_region
          %260 = dma.done [#allocation9], 16384
        $region56: #{tpu_custom_call.1} parent=39 // pred_fallthru
          _
        %s261 = sand.u32 %s32, 1
        %s262 = scalar_lea.sflag [#allocation3], %s261
        %s263 = sand.u32 %s32, 1
        %s264 = smul.addr %s263, 16
        %s265 = scalar_lea.vmem [#allocation2], %s264
        %p266 = pneg %p45
        %p267 = pneg %p42
        %p268 = pneg %p66
        %p269 = pneg %p63
        %p270 = pneg %p87
        %p271 = pneg %p84
        %p272 = pneg %p108
        %p273 = pneg %p105
        %p274 = pneg %p129
        %p275 = pneg %p126
        %p276 = pneg %p155
        %p277 = pneg %p152
        %s278 = sand.u32 %s142, 1
        %s279 = scalar_lea.sflag [#allocation4], %s278
        %s280 = sand.u32 %s142, 1
        %s281 = smul.addr %s280, 16
        %s282 = scalar_lea.vmem [#allocation10], %s281
        %v285 = vld [vmem:[%s244] sm:$0xff]
        %v286 = vld [vmem:[%s244 + $0x8] sm:$0xff]
        %v287 = vpack.c.bf16 %v285, %v285
        %v288 = vpack.c.bf16 %v286, %v286
        %v289 = vld [vmem:[#allocation5] sm:$0xff]
        %v290 = vld [vmem:[#allocation5 + $0x8] sm:$0xff]
        %v291 = vld [vmem:[#allocation5 + $0x20] sm:$0xff]
        %v292 = vld [vmem:[#allocation5 + $0x28] sm:$0xff]
        %v293 = vld [vmem:[#allocation5 + $0x40] sm:$0xff]
        %v294 = vld [vmem:[#allocation5 + $0x48] sm:$0xff]
        %v295 = vld [vmem:[#allocation5 + $0x60] sm:$0xff]
        %v296 = vld [vmem:[#allocation5 + $0x68] sm:$0xff]
        %v297 = vld [vmem:[#allocation5 + $0x80] sm:$0xff]
        %v298 = vld [vmem:[#allocation5 + $0x88] sm:$0xff]
        %v299 = vld [vmem:[#allocation5 + $0xa0] sm:$0xff]
        %v300 = vld [vmem:[#allocation5 + $0xa8] sm:$0xff]
        %v301 = vld [vmem:[#allocation5 + $0xc0] sm:$0xff]
        %v302 = vld [vmem:[#allocation5 + $0xc8] sm:$0xff]
        %v303 = vld [vmem:[#allocation5 + $0xe0] sm:$0xff]
        %v304 = vld [vmem:[#allocation5 + $0xe8] sm:$0xff]
        %v305 = vld [vmem:[#allocation5 + $0x100] sm:$0xff]
        %v306 = vld [vmem:[#allocation5 + $0x108] sm:$0xff]
        %v307 = vld [vmem:[#allocation5 + $0x120] sm:$0xff]
        %v308 = vld [vmem:[#allocation5 + $0x128] sm:$0xff]
        %v309 = vld [vmem:[#allocation5 + $0x140] sm:$0xff]
        %v310 = vld [vmem:[#allocation5 + $0x148] sm:$0xff]
        %v311 = vld [vmem:[#allocation5 + $0x160] sm:$0xff]
        %v312 = vld [vmem:[#allocation5 + $0x168] sm:$0xff]
        %v313 = vld [vmem:[#allocation5 + $0x180] sm:$0xff]
        %v314 = vld [vmem:[#allocation5 + $0x188] sm:$0xff]
        %v315 = vld [vmem:[#allocation5 + $0x1a0] sm:$0xff]
        %v316 = vld [vmem:[#allocation5 + $0x1a8] sm:$0xff]
        %v317 = vld [vmem:[#allocation5 + $0x1c0] sm:$0xff]
        %v318 = vld [vmem:[#allocation5 + $0x1c8] sm:$0xff]
        %v319 = vld [vmem:[#allocation5 + $0x1e0] sm:$0xff]
        %v320 = vld [vmem:[#allocation5 + $0x1e8] sm:$0xff]
        %v321 = vld [vmem:[#allocation5 + $0x200] sm:$0xff]
        %v322 = vld [vmem:[#allocation5 + $0x208] sm:$0xff]
        %v323 = vld [vmem:[#allocation5 + $0x220] sm:$0xff]
        %v324 = vld [vmem:[#allocation5 + $0x228] sm:$0xff]
        %v325 = vld [vmem:[#allocation5 + $0x240] sm:$0xff]
        %v326 = vld [vmem:[#allocation5 + $0x248] sm:$0xff]
        %v327 = vld [vmem:[#allocation5 + $0x260] sm:$0xff]
        %v328 = vld [vmem:[#allocation5 + $0x268] sm:$0xff]
        %v329 = vld [vmem:[#allocation5 + $0x280] sm:$0xff]
        %v330 = vld [vmem:[#allocation5 + $0x288] sm:$0xff]
        %v331 = vld [vmem:[#allocation5 + $0x2a0] sm:$0xff]
        %v332 = vld [vmem:[#allocation5 + $0x2a8] sm:$0xff]
        %v333 = vld [vmem:[#allocation5 + $0x2c0] sm:$0xff]
        %v334 = vld [vmem:[#allocation5 + $0x2c8] sm:$0xff]
        %v335 = vld [vmem:[#allocation5 + $0x2e0] sm:$0xff]
        %v336 = vld [vmem:[#allocation5 + $0x2e8] sm:$0xff]
        %v337 = vld [vmem:[#allocation5 + $0x300] sm:$0xff]
        %v338 = vld [vmem:[#allocation5 + $0x308] sm:$0xff]
        %v339 = vld [vmem:[#allocation5 + $0x320] sm:$0xff]
        %v340 = vld [vmem:[#allocation5 + $0x328] sm:$0xff]
        %v341 = vld [vmem:[#allocation5 + $0x340] sm:$0xff]
        %v342 = vld [vmem:[#allocation5 + $0x348] sm:$0xff]
        %v343 = vld [vmem:[#allocation5 + $0x360] sm:$0xff]
        %v344 = vld [vmem:[#allocation5 + $0x368] sm:$0xff]
        %v345 = vld [vmem:[#allocation5 + $0x380] sm:$0xff]
        %v346 = vld [vmem:[#allocation5 + $0x388] sm:$0xff]
        %v347 = vld [vmem:[#allocation5 + $0x3a0] sm:$0xff]
        %v348 = vld [vmem:[#allocation5 + $0x3a8] sm:$0xff]
        %v349 = vld [vmem:[#allocation5 + $0x3c0] sm:$0xff]
        %v350 = vld [vmem:[#allocation5 + $0x3c8] sm:$0xff]
        %v351 = vld [vmem:[#allocation5 + $0x3e0] sm:$0xff]
        %v352 = vld [vmem:[#allocation5 + $0x3e8] sm:$0xff]
        %v353 = vld [vmem:[#allocation7] sm:$0xf]
        %v355 = vlaneseq
        %v356 = vshrl.u32 %v355, 7
        %v357 = vsub.s32 0, %v356
        %v358 = vrot.slane %v353, %v357
        %v359 = vlaneseq
        %v360 = vshrl.u32 %v359, 7
        %v361 = vsub.s32 1, %v360
        %v362 = vrot.slane %v353, %v361
        %v363 = vlaneseq
        %v364 = vshrl.u32 %v363, 7
        %v365 = vsub.s32 2, %v364
        %v366 = vrot.slane %v353, %v365
        %v367 = vlaneseq
        %v368 = vshrl.u32 %v367, 7
        %v369 = vsub.s32 3, %v368
        %v370 = vrot.slane %v353, %v369
        %v439 = vunpack.c.l.b16 %v289
        %v440 = vunpack.c.h.b16 %v289
        %v441 = vunpack.c.l.b16 %v290
        %v442 = vunpack.c.h.b16 %v290
        %v443 = vunpack.c.l.b16 %v291
        %v444 = vunpack.c.h.b16 %v291
        %v445 = vunpack.c.l.b16 %v292
        %v446 = vunpack.c.h.b16 %v292
        %v447 = vunpack.c.l.b16 %v293
        %v448 = vunpack.c.h.b16 %v293
        %v449 = vunpack.c.l.b16 %v294
        %v450 = vunpack.c.h.b16 %v294
        %v451 = vunpack.c.l.b16 %v295
        %v452 = vunpack.c.h.b16 %v295
        %v453 = vunpack.c.l.b16 %v296
        %v454 = vunpack.c.h.b16 %v296
        %v455 = vunpack.c.l.b16 %v297
        %v456 = vunpack.c.h.b16 %v297
        %v457 = vunpack.c.l.b16 %v298
        %v458 = vunpack.c.h.b16 %v298
        %v459 = vunpack.c.l.b16 %v299
        %v460 = vunpack.c.h.b16 %v299
        %v461 = vunpack.c.l.b16 %v300
        %v462 = vunpack.c.h.b16 %v300
        %v463 = vunpack.c.l.b16 %v301
        %v464 = vunpack.c.h.b16 %v301
        %v465 = vunpack.c.l.b16 %v302
        %v466 = vunpack.c.h.b16 %v302
        %v467 = vunpack.c.l.b16 %v303
        %v468 = vunpack.c.h.b16 %v303
        %v469 = vunpack.c.l.b16 %v304
        %v470 = vunpack.c.h.b16 %v304
        %v471 = vunpack.c.l.b16 %v305
        %v472 = vunpack.c.h.b16 %v305
        %v473 = vunpack.c.l.b16 %v306
        %v474 = vunpack.c.h.b16 %v306
        %v475 = vunpack.c.l.b16 %v307
        %v476 = vunpack.c.h.b16 %v307
        %v477 = vunpack.c.l.b16 %v308
        %v478 = vunpack.c.h.b16 %v308
        %v479 = vunpack.c.l.b16 %v309
        %v480 = vunpack.c.h.b16 %v309
        %v481 = vunpack.c.l.b16 %v310
        %v482 = vunpack.c.h.b16 %v310
        %v483 = vunpack.c.l.b16 %v311
        %v484 = vunpack.c.h.b16 %v311
        %v485 = vunpack.c.l.b16 %v312
        %v486 = vunpack.c.h.b16 %v312
        %v487 = vunpack.c.l.b16 %v313
        %v488 = vunpack.c.h.b16 %v313
        %v489 = vunpack.c.l.b16 %v314
        %v490 = vunpack.c.h.b16 %v314
        %v491 = vunpack.c.l.b16 %v315
        %v492 = vunpack.c.h.b16 %v315
        %v493 = vunpack.c.l.b16 %v316
        %v494 = vunpack.c.h.b16 %v316
        %v495 = vunpack.c.l.b16 %v317
        %v496 = vunpack.c.h.b16 %v317
        %v497 = vunpack.c.l.b16 %v318
        %v498 = vunpack.c.h.b16 %v318
        %v499 = vunpack.c.l.b16 %v319
        %v500 = vunpack.c.h.b16 %v319
        %v501 = vunpack.c.l.b16 %v320
        %v502 = vunpack.c.h.b16 %v320
        %v503 = vunpack.c.l.b16 %v321
        %v504 = vunpack.c.h.b16 %v321
        %v505 = vunpack.c.l.b16 %v322
        %v506 = vunpack.c.h.b16 %v322
        %v507 = vunpack.c.l.b16 %v323
        %v508 = vunpack.c.h.b16 %v323
        %v509 = vunpack.c.l.b16 %v324
        %v510 = vunpack.c.h.b16 %v324
        %v511 = vunpack.c.l.b16 %v325
        %v512 = vunpack.c.h.b16 %v325
        %v513 = vunpack.c.l.b16 %v326
        %v514 = vunpack.c.h.b16 %v326
        %v515 = vunpack.c.l.b16 %v327
        %v516 = vunpack.c.h.b16 %v327
        %v517 = vunpack.c.l.b16 %v328
        %v518 = vunpack.c.h.b16 %v328
        %v519 = vunpack.c.l.b16 %v329
        %v520 = vunpack.c.h.b16 %v329
        %v521 = vunpack.c.l.b16 %v330
        %v522 = vunpack.c.h.b16 %v330
        %v523 = vunpack.c.l.b16 %v331
        %v524 = vunpack.c.h.b16 %v331
        %v525 = vunpack.c.l.b16 %v332
        %v526 = vunpack.c.h.b16 %v332
        %v527 = vunpack.c.l.b16 %v333
        %v528 = vunpack.c.h.b16 %v333
        %v529 = vunpack.c.l.b16 %v334
        %v530 = vunpack.c.h.b16 %v334
        %v531 = vunpack.c.l.b16 %v335
        %v532 = vunpack.c.h.b16 %v335
        %v533 = vunpack.c.l.b16 %v336
        %v534 = vunpack.c.h.b16 %v336
        %v535 = vunpack.c.l.b16 %v337
        %v536 = vunpack.c.h.b16 %v337
        %v537 = vunpack.c.l.b16 %v338
        %v538 = vunpack.c.h.b16 %v338
        %v539 = vunpack.c.l.b16 %v339
        %v540 = vunpack.c.h.b16 %v339
        %v541 = vunpack.c.l.b16 %v340
        %v542 = vunpack.c.h.b16 %v340
        %v543 = vunpack.c.l.b16 %v341
        %v544 = vunpack.c.h.b16 %v341
        %v545 = vunpack.c.l.b16 %v342
        %v546 = vunpack.c.h.b16 %v342
        %v547 = vunpack.c.l.b16 %v343
        %v548 = vunpack.c.h.b16 %v343
        %v549 = vunpack.c.l.b16 %v344
        %v550 = vunpack.c.h.b16 %v344
        %v551 = vunpack.c.l.b16 %v345
        %v552 = vunpack.c.h.b16 %v345
        %v553 = vunpack.c.l.b16 %v346
        %v554 = vunpack.c.h.b16 %v346
        %v555 = vunpack.c.l.b16 %v347
        %v556 = vunpack.c.h.b16 %v347
        %v557 = vunpack.c.l.b16 %v348
        %v558 = vunpack.c.h.b16 %v348
        %v559 = vunpack.c.l.b16 %v349
        %v560 = vunpack.c.h.b16 %v349
        %v561 = vunpack.c.l.b16 %v350
        %v562 = vunpack.c.h.b16 %v350
        %v563 = vunpack.c.l.b16 %v351
        %v564 = vunpack.c.h.b16 %v351
        %v565 = vunpack.c.l.b16 %v352
        %v566 = vunpack.c.h.b16 %v352
        %v567 = vpack.c.b16 %v443, %v439
        %v568 = vpack.c.b16 %v444, %v440
        %v569 = vpack.c.b16 %v445, %v441
        %v570 = vpack.c.b16 %v446, %v442
        %v571 = vpack.c.b16 %v451, %v447
        %v572 = vpack.c.b16 %v452, %v448
        %v573 = vpack.c.b16 %v453, %v449
        %v574 = vpack.c.b16 %v454, %v450
        %v575 = vpack.c.b16 %v459, %v455
        %v576 = vpack.c.b16 %v460, %v456
        %v577 = vpack.c.b16 %v461, %v457
        %v578 = vpack.c.b16 %v462, %v458
        %v579 = vpack.c.b16 %v467, %v463
        %v580 = vpack.c.b16 %v468, %v464
        %v581 = vpack.c.b16 %v469, %v465
        %v582 = vpack.c.b16 %v470, %v466
        %v583 = vpack.c.b16 %v475, %v471
        %v584 = vpack.c.b16 %v476, %v472
        %v585 = vpack.c.b16 %v477, %v473
        %v586 = vpack.c.b16 %v478, %v474
        %v587 = vpack.c.b16 %v483, %v479
        %v588 = vpack.c.b16 %v484, %v480
        %v589 = vpack.c.b16 %v485, %v481
        %v590 = vpack.c.b16 %v486, %v482
        %v591 = vpack.c.b16 %v491, %v487
        %v592 = vpack.c.b16 %v492, %v488
        %v593 = vpack.c.b16 %v493, %v489
        %v594 = vpack.c.b16 %v494, %v490
        %v595 = vpack.c.b16 %v499, %v495
        %v596 = vpack.c.b16 %v500, %v496
        %v597 = vpack.c.b16 %v501, %v497
        %v598 = vpack.c.b16 %v502, %v498
        %v599 = vpack.c.b16 %v507, %v503
        %v600 = vpack.c.b16 %v508, %v504
        %v601 = vpack.c.b16 %v509, %v505
        %v602 = vpack.c.b16 %v510, %v506
        %v603 = vpack.c.b16 %v515, %v511
        %v604 = vpack.c.b16 %v516, %v512
        %v605 = vpack.c.b16 %v517, %v513
        %v606 = vpack.c.b16 %v518, %v514
        %v607 = vpack.c.b16 %v523, %v519
        %v608 = vpack.c.b16 %v524, %v520
        %v609 = vpack.c.b16 %v525, %v521
        %v610 = vpack.c.b16 %v526, %v522
        %v611 = vpack.c.b16 %v531, %v527
        %v612 = vpack.c.b16 %v532, %v528
        %v613 = vpack.c.b16 %v533, %v529
        %v614 = vpack.c.b16 %v534, %v530
        %v615 = vpack.c.b16 %v539, %v535
        %v616 = vpack.c.b16 %v540, %v536
        %v617 = vpack.c.b16 %v541, %v537
        %v618 = vpack.c.b16 %v542, %v538
        %v619 = vpack.c.b16 %v547, %v543
        %v620 = vpack.c.b16 %v548, %v544
        %v621 = vpack.c.b16 %v549, %v545
        %v622 = vpack.c.b16 %v550, %v546
        %v623 = vpack.c.b16 %v555, %v551
        %v624 = vpack.c.b16 %v556, %v552
        %v625 = vpack.c.b16 %v557, %v553
        %v626 = vpack.c.b16 %v558, %v554
        %v627 = vpack.c.b16 %v563, %v559
        %v628 = vpack.c.b16 %v564, %v560
        %v629 = vpack.c.b16 %v565, %v561
        %v630 = vpack.c.b16 %v566, %v562
        %695 = vmatprep.subr.bf16.mxu0 %v568
        %696 = vmatpush1.bf16.msra.mxu0 %v567
        %697 = vmatprep.subr.bf16.mxu0 %v572
        %698 = vmatpush1.bf16.msra.mxu0 %v571
        %699 = vmatprep.subr.bf16.mxu0 %v576
        %700 = vmatpush1.bf16.msra.mxu0 %v575
        %701 = vmatprep.subr.bf16.mxu0 %v580
        %702 = vmatpush1.bf16.msra.mxu0 %v579
        %703 = vmatprep.subr.bf16.mxu0 %v584
        %704 = vmatpush1.bf16.msra.mxu0 %v583
        %705 = vmatprep.subr.bf16.mxu0 %v588
        %706 = vmatpush1.bf16.msra.mxu0 %v587
        %707 = vmatprep.subr.bf16.mxu0 %v592
        %708 = vmatpush1.bf16.msra.mxu0 %v591
        %709 = vmatprep.subr.bf16.mxu0 %v596
        %710 = vmatpush1.bf16.msra.mxu0 %v595
        %711 = vmatprep.subr.bf16.mxu0 %v600
        %712 = vmatpush1.bf16.msra.mxu0 %v599
        %713 = vmatprep.subr.bf16.mxu0 %v604
        %714 = vmatpush1.bf16.msra.mxu0 %v603
        %715 = vmatprep.subr.bf16.mxu0 %v608
        %716 = vmatpush1.bf16.msra.mxu0 %v607
        %717 = vmatprep.subr.bf16.mxu0 %v612
        %718 = vmatpush1.bf16.msra.mxu0 %v611
        %719 = vmatprep.subr.bf16.mxu0 %v616
        %720 = vmatpush1.bf16.msra.mxu0 %v615
        %721 = vmatprep.subr.bf16.mxu0 %v620
        %722 = vmatpush1.bf16.msra.mxu0 %v619
        %723 = vmatprep.subr.bf16.mxu0 %v624
        %724 = vmatpush1.bf16.msra.mxu0 %v623
        %725 = vmatprep.subr.bf16.mxu0 %v628
        %726 = vmatpush1.bf16.msra.mxu0 %v627
        %727 = vmatprep.mubr.bf16.mxu0 %v288
        %728 = vmatmul.mubr.bf16.gmra.mrb[0].mxu0 %v287
        %v729 = vpop.f32.mrb[0].mxu0
        %v730 = vadd.f32 %v358, %v729
        %v731 = vpop.f32.mrb[0].mxu0
        %v732 = vadd.f32 %v362, %v731
        %v733 = vpop.f32.mrb[0].mxu0
        %v734 = vpop.f32.mrb[0].mxu0
        %735 = vdwg.mxu0
        %736 = vmatprep.subr.bf16.mxu0 %v570
        %737 = vmatpush1.bf16.msra.mxu0 %v569
        %738 = vmatprep.subr.bf16.mxu0 %v574
        %739 = vmatpush1.bf16.msra.mxu0 %v573
        %740 = vmatprep.subr.bf16.mxu0 %v578
        %741 = vmatpush1.bf16.msra.mxu0 %v577
        %742 = vmatprep.subr.bf16.mxu0 %v582
        %743 = vmatpush1.bf16.msra.mxu0 %v581
        %744 = vmatprep.subr.bf16.mxu0 %v586
        %745 = vmatpush1.bf16.msra.mxu0 %v585
        %746 = vmatprep.subr.bf16.mxu0 %v590
        %747 = vmatpush1.bf16.msra.mxu0 %v589
        %748 = vmatprep.subr.bf16.mxu0 %v594
        %749 = vmatpush1.bf16.msra.mxu0 %v593
        %750 = vmatprep.subr.bf16.mxu0 %v598
        %751 = vmatpush1.bf16.msra.mxu0 %v597
        %752 = vmatprep.subr.bf16.mxu0 %v602
        %753 = vmatpush1.bf16.msra.mxu0 %v601
        %754 = vmatprep.subr.bf16.mxu0 %v606
        %755 = vmatpush1.bf16.msra.mxu0 %v605
        %756 = vmatprep.subr.bf16.mxu0 %v610
        %757 = vmatpush1.bf16.msra.mxu0 %v609
        %758 = vmatprep.subr.bf16.mxu0 %v614
        %759 = vmatpush1.bf16.msra.mxu0 %v613
        %760 = vmatprep.subr.bf16.mxu0 %v618
        %761 = vmatpush1.bf16.msra.mxu0 %v617
        %762 = vmatprep.subr.bf16.mxu0 %v622
        %763 = vmatpush1.bf16.msra.mxu0 %v621
        %764 = vmatprep.subr.bf16.mxu0 %v626
        %765 = vmatpush1.bf16.msra.mxu0 %v625
        %766 = vmatprep.subr.bf16.mxu0 %v630
        %767 = vmatpush1.bf16.msra.mxu0 %v629
        %768 = vmatprep.mubr.bf16.mxu0 %v288
        %769 = vmatmul.mubr.bf16.gmra.mrb[0].mxu0 %v287
        %v770 = vpop.f32.mrb[0].mxu0
        %v771 = vadd.f32 %v366, %v770
        %v772 = vpop.f32.mrb[0].mxu0
        %v773 = vadd.f32 %v370, %v772
        %v774 = vpop.f32.mrb[0].mxu0
        %v775 = vpop.f32.mrb[0].mxu0
        %776 = vdwg.mxu0
        %v777 = vpack.c.bf16 %v730, %v730
        %v778 = vpack.c.bf16 %v732, %v732
        %v779 = vpack.c.bf16 %v771, %v771
        %v780 = vpack.c.bf16 %v773, %v773
        %v781 = vmul.bf16 %v777, 1071267802
        %v782 = vmul.bf16 %v778, 1071267802
        %v783 = vmul.bf16 %v779, 1071267802
        %v784 = vmul.bf16 %v780, 1071267802
        %v785 = vxor.u32 %v781, 2147516416
        %v786 = vxor.u32 %v782, 2147516416
        %v787 = vxor.u32 %v783, 2147516416
        %v788 = vxor.u32 %v784, 2147516416
        %v790 = vmul.bf16 %v785, 1069105081
        %v791 = vpow.bf16.pop %v790
        %v793 = vmul.bf16 %v786, 1069105081
        %v794 = vpow.bf16.pop %v793
        %v796 = vmul.bf16 %v787, 1069105081
        %v797 = vpow.bf16.pop %v796
        %v799 = vmul.bf16 %v788, 1069105081
        %v800 = vpow.bf16.pop %v799
        %v801 = vadd.bf16 %v791, 1065369472
        %v802 = vadd.bf16 %v794, 1065369472
        %v803 = vadd.bf16 %v797, 1065369472
        %v804 = vadd.bf16 %v800, 1065369472
        %v805 = vrcp.bf16.pop %v801
        %v806 = vmul.bf16 1065369472, %v805
        %v807 = vrcp.bf16.pop %v802
        %v808 = vmul.bf16 1065369472, %v807
        %v809 = vrcp.bf16.pop %v803
        %v810 = vmul.bf16 1065369472, %v809
        %v811 = vrcp.bf16.pop %v804
        %v812 = vmul.bf16 1065369472, %v811
        %v813 = vmul.bf16 %v777, %v806
        %v814 = vmul.bf16 %v778, %v808
        %v815 = vmul.bf16 %v779, %v810
        %v816 = vmul.bf16 %v780, %v812
        %v817 = vld [vmem:[#allocation8] sm:$0xff]
        %v818 = vld [vmem:[#allocation8 + $0x8] sm:$0xff]
        %v819 = vld [vmem:[#allocation8 + $0x10] sm:$0xff]
        %v820 = vld [vmem:[#allocation8 + $0x18] sm:$0xff]
        %v821 = vld [vmem:[#allocation8 + $0x20] sm:$0xff]
        %v822 = vld [vmem:[#allocation8 + $0x28] sm:$0xff]
        %v823 = vld [vmem:[#allocation8 + $0x30] sm:$0xff]
        %v824 = vld [vmem:[#allocation8 + $0x38] sm:$0xff]
        %v825 = vld [vmem:[#allocation8 + $0x40] sm:$0xff]
        %v826 = vld [vmem:[#allocation8 + $0x48] sm:$0xff]
        %v827 = vld [vmem:[#allocation8 + $0x50] sm:$0xff]
        %v828 = vld [vmem:[#allocation8 + $0x58] sm:$0xff]
        %v829 = vld [vmem:[#allocation8 + $0x60] sm:$0xff]
        %v830 = vld [vmem:[#allocation8 + $0x68] sm:$0xff]
        %v831 = vld [vmem:[#allocation8 + $0x70] sm:$0xff]
        %v832 = vld [vmem:[#allocation8 + $0x78] sm:$0xff]
        %v833 = vld [vmem:[#allocation8 + $0x80] sm:$0xff]
        %v834 = vld [vmem:[#allocation8 + $0x88] sm:$0xff]
        %v835 = vld [vmem:[#allocation8 + $0x90] sm:$0xff]
        %v836 = vld [vmem:[#allocation8 + $0x98] sm:$0xff]
        %v837 = vld [vmem:[#allocation8 + $0xa0] sm:$0xff]
        %v838 = vld [vmem:[#allocation8 + $0xa8] sm:$0xff]
        %v839 = vld [vmem:[#allocation8 + $0xb0] sm:$0xff]
        %v840 = vld [vmem:[#allocation8 + $0xb8] sm:$0xff]
        %v841 = vld [vmem:[#allocation8 + $0xc0] sm:$0xff]
        %v842 = vld [vmem:[#allocation8 + $0xc8] sm:$0xff]
        %v843 = vld [vmem:[#allocation8 + $0xd0] sm:$0xff]
        %v844 = vld [vmem:[#allocation8 + $0xd8] sm:$0xff]
        %v845 = vld [vmem:[#allocation8 + $0xe0] sm:$0xff]
        %v846 = vld [vmem:[#allocation8 + $0xe8] sm:$0xff]
        %v847 = vld [vmem:[#allocation8 + $0xf0] sm:$0xff]
        %v848 = vld [vmem:[#allocation8 + $0xf8] sm:$0xff]
        %v849 = vld [vmem:[#allocation8 + $0x100] sm:$0xff]
        %v850 = vld [vmem:[#allocation8 + $0x108] sm:$0xff]
        %v851 = vld [vmem:[#allocation8 + $0x110] sm:$0xff]
        %v852 = vld [vmem:[#allocation8 + $0x118] sm:$0xff]
        %v853 = vld [vmem:[#allocation8 + $0x120] sm:$0xff]
        %v854 = vld [vmem:[#allocation8 + $0x128] sm:$0xff]
        %v855 = vld [vmem:[#allocation8 + $0x130] sm:$0xff]
        %v856 = vld [vmem:[#allocation8 + $0x138] sm:$0xff]
        %v857 = vld [vmem:[#allocation8 + $0x140] sm:$0xff]
        %v858 = vld [vmem:[#allocation8 + $0x148] sm:$0xff]
        %v859 = vld [vmem:[#allocation8 + $0x150] sm:$0xff]
        %v860 = vld [vmem:[#allocation8 + $0x158] sm:$0xff]
        %v861 = vld [vmem:[#allocation8 + $0x160] sm:$0xff]
        %v862 = vld [vmem:[#allocation8 + $0x168] sm:$0xff]
        %v863 = vld [vmem:[#allocation8 + $0x170] sm:$0xff]
        %v864 = vld [vmem:[#allocation8 + $0x178] sm:$0xff]
        %v865 = vld [vmem:[#allocation8 + $0x180] sm:$0xff]
        %v866 = vld [vmem:[#allocation8 + $0x188] sm:$0xff]
        %v867 = vld [vmem:[#allocation8 + $0x190] sm:$0xff]
        %v868 = vld [vmem:[#allocation8 + $0x198] sm:$0xff]
        %v869 = vld [vmem:[#allocation8 + $0x1a0] sm:$0xff]
        %v870 = vld [vmem:[#allocation8 + $0x1a8] sm:$0xff]
        %v871 = vld [vmem:[#allocation8 + $0x1b0] sm:$0xff]
        %v872 = vld [vmem:[#allocation8 + $0x1b8] sm:$0xff]
        %v873 = vld [vmem:[#allocation8 + $0x1c0] sm:$0xff]
        %v874 = vld [vmem:[#allocation8 + $0x1c8] sm:$0xff]
        %v875 = vld [vmem:[#allocation8 + $0x1d0] sm:$0xff]
        %v876 = vld [vmem:[#allocation8 + $0x1d8] sm:$0xff]
        %v877 = vld [vmem:[#allocation8 + $0x1e0] sm:$0xff]
        %v878 = vld [vmem:[#allocation8 + $0x1e8] sm:$0xff]
        %v879 = vld [vmem:[#allocation8 + $0x1f0] sm:$0xff]
        %v880 = vld [vmem:[#allocation8 + $0x1f8] sm:$0xff]
        %v881 = vld [vmem:[#allocation5 + $0x10] sm:$0xff]
        %v882 = vld [vmem:[#allocation5 + $0x18] sm:$0xff]
        %v883 = vld [vmem:[#allocation5 + $0x30] sm:$0xff]
        %v884 = vld [vmem:[#allocation5 + $0x38] sm:$0xff]
        %v885 = vld [vmem:[#allocation5 + $0x50] sm:$0xff]
        %v886 = vld [vmem:[#allocation5 + $0x58] sm:$0xff]
        %v887 = vld [vmem:[#allocation5 + $0x70] sm:$0xff]
        %v888 = vld [vmem:[#allocation5 + $0x78] sm:$0xff]
        %v889 = vld [vmem:[#allocation5 + $0x90] sm:$0xff]
        %v890 = vld [vmem:[#allocation5 + $0x98] sm:$0xff]
        %v891 = vld [vmem:[#allocation5 + $0xb0] sm:$0xff]
        %v892 = vld [vmem:[#allocation5 + $0xb8] sm:$0xff]
        %v893 = vld [vmem:[#allocation5 + $0xd0] sm:$0xff]
        %v894 = vld [vmem:[#allocation5 + $0xd8] sm:$0xff]
        %v895 = vld [vmem:[#allocation5 + $0xf0] sm:$0xff]
        %v896 = vld [vmem:[#allocation5 + $0xf8] sm:$0xff]
        %v897 = vld [vmem:[#allocation5 + $0x110] sm:$0xff]
        %v898 = vld [vmem:[#allocation5 + $0x118] sm:$0xff]
        %v899 = vld [vmem:[#allocation5 + $0x130] sm:$0xff]
        %v900 = vld [vmem:[#allocation5 + $0x138] sm:$0xff]
        %v901 = vld [vmem:[#allocation5 + $0x150] sm:$0xff]
        %v902 = vld [vmem:[#allocation5 + $0x158] sm:$0xff]
        %v903 = vld [vmem:[#allocation5 + $0x170] sm:$0xff]
        %v904 = vld [vmem:[#allocation5 + $0x178] sm:$0xff]
        %v905 = vld [vmem:[#allocation5 + $0x190] sm:$0xff]
        %v906 = vld [vmem:[#allocation5 + $0x198] sm:$0xff]
        %v907 = vld [vmem:[#allocation5 + $0x1b0] sm:$0xff]
        %v908 = vld [vmem:[#allocation5 + $0x1b8] sm:$0xff]
        %v909 = vld [vmem:[#allocation5 + $0x1d0] sm:$0xff]
        %v910 = vld [vmem:[#allocation5 + $0x1d8] sm:$0xff]
        %v911 = vld [vmem:[#allocation5 + $0x1f0] sm:$0xff]
        %v912 = vld [vmem:[#allocation5 + $0x1f8] sm:$0xff]
        %v913 = vld [vmem:[#allocation5 + $0x210] sm:$0xff]
        %v914 = vld [vmem:[#allocation5 + $0x218] sm:$0xff]
        %v915 = vld [vmem:[#allocation5 + $0x230] sm:$0xff]
        %v916 = vld [vmem:[#allocation5 + $0x238] sm:$0xff]
        %v917 = vld [vmem:[#allocation5 + $0x250] sm:$0xff]
        %v918 = vld [vmem:[#allocation5 + $0x258] sm:$0xff]
        %v919 = vld [vmem:[#allocation5 + $0x270] sm:$0xff]
        %v920 = vld [vmem:[#allocation5 + $0x278] sm:$0xff]
        %v921 = vld [vmem:[#allocation5 + $0x290] sm:$0xff]
        %v922 = vld [vmem:[#allocation5 + $0x298] sm:$0xff]
        %v923 = vld [vmem:[#allocation5 + $0x2b0] sm:$0xff]
        %v924 = vld [vmem:[#allocation5 + $0x2b8] sm:$0xff]
        %v925 = vld [vmem:[#allocation5 + $0x2d0] sm:$0xff]
        %v926 = vld [vmem:[#allocation5 + $0x2d8] sm:$0xff]
        %v927 = vld [vmem:[#allocation5 + $0x2f0] sm:$0xff]
        %v928 = vld [vmem:[#allocation5 + $0x2f8] sm:$0xff]
        %v929 = vld [vmem:[#allocation5 + $0x310] sm:$0xff]
        %v930 = vld [vmem:[#allocation5 + $0x318] sm:$0xff]
        %v931 = vld [vmem:[#allocation5 + $0x330] sm:$0xff]
        %v932 = vld [vmem:[#allocation5 + $0x338] sm:$0xff]
        %v933 = vld [vmem:[#allocation5 + $0x350] sm:$0xff]
        %v934 = vld [vmem:[#allocation5 + $0x358] sm:$0xff]
        %v935 = vld [vmem:[#allocation5 + $0x370] sm:$0xff]
        %v936 = vld [vmem:[#allocation5 + $0x378] sm:$0xff]
        %v937 = vld [vmem:[#allocation5 + $0x390] sm:$0xff]
        %v938 = vld [vmem:[#allocation5 + $0x398] sm:$0xff]
        %v939 = vld [vmem:[#allocation5 + $0x3b0] sm:$0xff]
        %v940 = vld [vmem:[#allocation5 + $0x3b8] sm:$0xff]
        %v941 = vld [vmem:[#allocation5 + $0x3d0] sm:$0xff]
        %v942 = vld [vmem:[#allocation5 + $0x3d8] sm:$0xff]
        %v943 = vld [vmem:[#allocation5 + $0x3f0] sm:$0xff]
        %v944 = vld [vmem:[#allocation5 + $0x3f8] sm:$0xff]
        %v945 = vld [vmem:[#allocation7 + $0x4] sm:$0xf]
        %v947 = vlaneseq
        %v948 = vshrl.u32 %v947, 7
        %v949 = vsub.s32 0, %v948
        %v950 = vrot.slane %v945, %v949
        %v951 = vlaneseq
        %v952 = vshrl.u32 %v951, 7
        %v953 = vsub.s32 1, %v952
        %v954 = vrot.slane %v945, %v953
        %v955 = vlaneseq
        %v956 = vshrl.u32 %v955, 7
        %v957 = vsub.s32 2, %v956
        %v958 = vrot.slane %v945, %v957
        %v959 = vlaneseq
        %v960 = vshrl.u32 %v959, 7
        %v961 = vsub.s32 3, %v960
        %v962 = vrot.slane %v945, %v961
        %v1031 = vunpack.c.l.b16 %v881
        %v1032 = vunpack.c.h.b16 %v881
        %v1033 = vunpack.c.l.b16 %v882
        %v1034 = vunpack.c.h.b16 %v882
        %v1035 = vunpack.c.l.b16 %v883
        %v1036 = vunpack.c.h.b16 %v883
        %v1037 = vunpack.c.l.b16 %v884
        %v1038 = vunpack.c.h.b16 %v884
        %v1039 = vunpack.c.l.b16 %v885
        %v1040 = vunpack.c.h.b16 %v885
        %v1041 = vunpack.c.l.b16 %v886
        %v1042 = vunpack.c.h.b16 %v886
        %v1043 = vunpack.c.l.b16 %v887
        %v1044 = vunpack.c.h.b16 %v887
        %v1045 = vunpack.c.l.b16 %v888
        %v1046 = vunpack.c.h.b16 %v888
        %v1047 = vunpack.c.l.b16 %v889
        %v1048 = vunpack.c.h.b16 %v889
        %v1049 = vunpack.c.l.b16 %v890
        %v1050 = vunpack.c.h.b16 %v890
        %v1051 = vunpack.c.l.b16 %v891
        %v1052 = vunpack.c.h.b16 %v891
        %v1053 = vunpack.c.l.b16 %v892
        %v1054 = vunpack.c.h.b16 %v892
        %v1055 = vunpack.c.l.b16 %v893
        %v1056 = vunpack.c.h.b16 %v893
        %v1057 = vunpack.c.l.b16 %v894
        %v1058 = vunpack.c.h.b16 %v894
        %v1059 = vunpack.c.l.b16 %v895
        %v1060 = vunpack.c.h.b16 %v895
        %v1061 = vunpack.c.l.b16 %v896
        %v1062 = vunpack.c.h.b16 %v896
        %v1063 = vunpack.c.l.b16 %v897
        %v1064 = vunpack.c.h.b16 %v897
        %v1065 = vunpack.c.l.b16 %v898
        %v1066 = vunpack.c.h.b16 %v898
        %v1067 = vunpack.c.l.b16 %v899
        %v1068 = vunpack.c.h.b16 %v899
        %v1069 = vunpack.c.l.b16 %v900
        %v1070 = vunpack.c.h.b16 %v900
        %v1071 = vunpack.c.l.b16 %v901
        %v1072 = vunpack.c.h.b16 %v901
        %v1073 = vunpack.c.l.b16 %v902
        %v1074 = vunpack.c.h.b16 %v902
        %v1075 = vunpack.c.l.b16 %v903
        %v1076 = vunpack.c.h.b16 %v903
        %v1077 = vunpack.c.l.b16 %v904
        %v1078 = vunpack.c.h.b16 %v904
        %v1079 = vunpack.c.l.b16 %v905
        %v1080 = vunpack.c.h.b16 %v905
        %v1081 = vunpack.c.l.b16 %v906
        %v1082 = vunpack.c.h.b16 %v906
        %v1083 = vunpack.c.l.b16 %v907
        %v1084 = vunpack.c.h.b16 %v907
        %v1085 = vunpack.c.l.b16 %v908
        %v1086 = vunpack.c.h.b16 %v908
        %v1087 = vunpack.c.l.b16 %v909
        %v1088 = vunpack.c.h.b16 %v909
        %v1089 = vunpack.c.l.b16 %v910
        %v1090 = vunpack.c.h.b16 %v910
        %v1091 = vunpack.c.l.b16 %v911
        %v1092 = vunpack.c.h.b16 %v911
        %v1093 = vunpack.c.l.b16 %v912
        %v1094 = vunpack.c.h.b16 %v912
        %v1095 = vunpack.c.l.b16 %v913
        %v1096 = vunpack.c.h.b16 %v913
        %v1097 = vunpack.c.l.b16 %v914
        %v1098 = vunpack.c.h.b16 %v914
        %v1099 = vunpack.c.l.b16 %v915
        %v1100 = vunpack.c.h.b16 %v915
        %v1101 = vunpack.c.l.b16 %v916
        %v1102 = vunpack.c.h.b16 %v916
        %v1103 = vunpack.c.l.b16 %v917
        %v1104 = vunpack.c.h.b16 %v917
        %v1105 = vunpack.c.l.b16 %v918
        %v1106 = vunpack.c.h.b16 %v918
        %v1107 = vunpack.c.l.b16 %v919
        %v1108 = vunpack.c.h.b16 %v919
        %v1109 = vunpack.c.l.b16 %v920
        %v1110 = vunpack.c.h.b16 %v920
        %v1111 = vunpack.c.l.b16 %v921
        %v1112 = vunpack.c.h.b16 %v921
        %v1113 = vunpack.c.l.b16 %v922
        %v1114 = vunpack.c.h.b16 %v922
        %v1115 = vunpack.c.l.b16 %v923
        %v1116 = vunpack.c.h.b16 %v923
        %v1117 = vunpack.c.l.b16 %v924
        %v1118 = vunpack.c.h.b16 %v924
        %v1119 = vunpack.c.l.b16 %v925
        %v1120 = vunpack.c.h.b16 %v925
        %v1121 = vunpack.c.l.b16 %v926
        %v1122 = vunpack.c.h.b16 %v926
        %v1123 = vunpack.c.l.b16 %v927
        %v1124 = vunpack.c.h.b16 %v927
        %v1125 = vunpack.c.l.b16 %v928
        %v1126 = vunpack.c.h.b16 %v928
        %v1127 = vunpack.c.l.b16 %v929
        %v1128 = vunpack.c.h.b16 %v929
        %v1129 = vunpack.c.l.b16 %v930
        %v1130 = vunpack.c.h.b16 %v930
        %v1131 = vunpack.c.l.b16 %v931
        %v1132 = vunpack.c.h.b16 %v931
        %v1133 = vunpack.c.l.b16 %v932
        %v1134 = vunpack.c.h.b16 %v932
        %v1135 = vunpack.c.l.b16 %v933
        %v1136 = vunpack.c.h.b16 %v933
        %v1137 = vunpack.c.l.b16 %v934
        %v1138 = vunpack.c.h.b16 %v934
        %v1139 = vunpack.c.l.b16 %v935
        %v1140 = vunpack.c.h.b16 %v935
        %v1141 = vunpack.c.l.b16 %v936
        %v1142 = vunpack.c.h.b16 %v936
        %v1143 = vunpack.c.l.b16 %v937
        %v1144 = vunpack.c.h.b16 %v937
        %v1145 = vunpack.c.l.b16 %v938
        %v1146 = vunpack.c.h.b16 %v938
        %v1147 = vunpack.c.l.b16 %v939
        %v1148 = vunpack.c.h.b16 %v939
        %v1149 = vunpack.c.l.b16 %v940
        %v1150 = vunpack.c.h.b16 %v940
        %v1151 = vunpack.c.l.b16 %v941
        %v1152 = vunpack.c.h.b16 %v941
        %v1153 = vunpack.c.l.b16 %v942
        %v1154 = vunpack.c.h.b16 %v942
        %v1155 = vunpack.c.l.b16 %v943
        %v1156 = vunpack.c.h.b16 %v943
        %v1157 = vunpack.c.l.b16 %v944
        %v1158 = vunpack.c.h.b16 %v944
        %v1159 = vpack.c.b16 %v1035, %v1031
        %v1160 = vpack.c.b16 %v1036, %v1032
        %v1161 = vpack.c.b16 %v1037, %v1033
        %v1162 = vpack.c.b16 %v1038, %v1034
        %v1163 = vpack.c.b16 %v1043, %v1039
        %v1164 = vpack.c.b16 %v1044, %v1040
        %v1165 = vpack.c.b16 %v1045, %v1041
        %v1166 = vpack.c.b16 %v1046, %v1042
        %v1167 = vpack.c.b16 %v1051, %v1047
        %v1168 = vpack.c.b16 %v1052, %v1048
        %v1169 = vpack.c.b16 %v1053, %v1049
        %v1170 = vpack.c.b16 %v1054, %v1050
        %v1171 = vpack.c.b16 %v1059, %v1055
        %v1172 = vpack.c.b16 %v1060, %v1056
        %v1173 = vpack.c.b16 %v1061, %v1057
        %v1174 = vpack.c.b16 %v1062, %v1058
        %v1175 = vpack.c.b16 %v1067, %v1063
        %v1176 = vpack.c.b16 %v1068, %v1064
        %v1177 = vpack.c.b16 %v1069, %v1065
        %v1178 = vpack.c.b16 %v1070, %v1066
        %v1179 = vpack.c.b16 %v1075, %v1071
        %v1180 = vpack.c.b16 %v1076, %v1072
        %v1181 = vpack.c.b16 %v1077, %v1073
        %v1182 = vpack.c.b16 %v1078, %v1074
        %v1183 = vpack.c.b16 %v1083, %v1079
        %v1184 = vpack.c.b16 %v1084, %v1080
        %v1185 = vpack.c.b16 %v1085, %v1081
        %v1186 = vpack.c.b16 %v1086, %v1082
        %v1187 = vpack.c.b16 %v1091, %v1087
        %v1188 = vpack.c.b16 %v1092, %v1088
        %v1189 = vpack.c.b16 %v1093, %v1089
        %v1190 = vpack.c.b16 %v1094, %v1090
        %v1191 = vpack.c.b16 %v1099, %v1095
        %v1192 = vpack.c.b16 %v1100, %v1096
        %v1193 = vpack.c.b16 %v1101, %v1097
        %v1194 = vpack.c.b16 %v1102, %v1098
        %v1195 = vpack.c.b16 %v1107, %v1103
        %v1196 = vpack.c.b16 %v1108, %v1104
        %v1197 = vpack.c.b16 %v1109, %v1105
        %v1198 = vpack.c.b16 %v1110, %v1106
        %v1199 = vpack.c.b16 %v1115, %v1111
        %v1200 = vpack.c.b16 %v1116, %v1112
        %v1201 = vpack.c.b16 %v1117, %v1113
        %v1202 = vpack.c.b16 %v1118, %v1114
        %v1203 = vpack.c.b16 %v1123, %v1119
        %v1204 = vpack.c.b16 %v1124, %v1120
        %v1205 = vpack.c.b16 %v1125, %v1121
        %v1206 = vpack.c.b16 %v1126, %v1122
        %v1207 = vpack.c.b16 %v1131, %v1127
        %v1208 = vpack.c.b16 %v1132, %v1128
        %v1209 = vpack.c.b16 %v1133, %v1129
        %v1210 = vpack.c.b16 %v1134, %v1130
        %v1211 = vpack.c.b16 %v1139, %v1135
        %v1212 = vpack.c.b16 %v1140, %v1136
        %v1213 = vpack.c.b16 %v1141, %v1137
        %v1214 = vpack.c.b16 %v1142, %v1138
        %v1215 = vpack.c.b16 %v1147, %v1143
        %v1216 = vpack.c.b16 %v1148, %v1144
        %v1217 = vpack.c.b16 %v1149, %v1145
        %v1218 = vpack.c.b16 %v1150, %v1146
        %v1219 = vpack.c.b16 %v1155, %v1151
        %v1220 = vpack.c.b16 %v1156, %v1152
        %v1221 = vpack.c.b16 %v1157, %v1153
        %v1222 = vpack.c.b16 %v1158, %v1154
        %1287 = vmatprep.subr.bf16.mxu0 %v1160
        %1288 = vmatpush1.bf16.msra.mxu0 %v1159
        %1289 = vmatprep.subr.bf16.mxu0 %v1164
        %1290 = vmatpush1.bf16.msra.mxu0 %v1163
        %1291 = vmatprep.subr.bf16.mxu0 %v1168
        %1292 = vmatpush1.bf16.msra.mxu0 %v1167
        %1293 = vmatprep.subr.bf16.mxu0 %v1172
        %1294 = vmatpush1.bf16.msra.mxu0 %v1171
        %1295 = vmatprep.subr.bf16.mxu0 %v1176
        %1296 = vmatpush1.bf16.msra.mxu0 %v1175
        %1297 = vmatprep.subr.bf16.mxu0 %v1180
        %1298 = vmatpush1.bf16.msra.mxu0 %v1179
        %1299 = vmatprep.subr.bf16.mxu0 %v1184
        %1300 = vmatpush1.bf16.msra.mxu0 %v1183
        %1301 = vmatprep.subr.bf16.mxu0 %v1188
        %1302 = vmatpush1.bf16.msra.mxu0 %v1187
        %1303 = vmatprep.subr.bf16.mxu0 %v1192
        %1304 = vmatpush1.bf16.msra.mxu0 %v1191
        %1305 = vmatprep.subr.bf16.mxu0 %v1196
        %1306 = vmatpush1.bf16.msra.mxu0 %v1195
        %1307 = vmatprep.subr.bf16.mxu0 %v1200
        %1308 = vmatpush1.bf16.msra.mxu0 %v1199
        %1309 = vmatprep.subr.bf16.mxu0 %v1204
        %1310 = vmatpush1.bf16.msra.mxu0 %v1203
        %1311 = vmatprep.subr.bf16.mxu0 %v1208
        %1312 = vmatpush1.bf16.msra.mxu0 %v1207
        %1313 = vmatprep.subr.bf16.mxu0 %v1212
        %1314 = vmatpush1.bf16.msra.mxu0 %v1211
        %1315 = vmatprep.subr.bf16.mxu0 %v1216
        %1316 = vmatpush1.bf16.msra.mxu0 %v1215
        %1317 = vmatprep.subr.bf16.mxu0 %v1220
        %1318 = vmatpush1.bf16.msra.mxu0 %v1219
        %1319 = vmatprep.mubr.bf16.mxu0 %v288
        %1320 = vmatmul.mubr.bf16.gmra.mrb[0].mxu0 %v287
        %v1321 = vpop.f32.mrb[0].mxu0
        %v1322 = vadd.f32 %v950, %v1321
        %v1323 = vpop.f32.mrb[0].mxu0
        %v1324 = vadd.f32 %v954, %v1323
        %v1325 = vpop.f32.mrb[0].mxu0
        %v1326 = vpop.f32.mrb[0].mxu0
        %1327 = vdwg.mxu0
        %1328 = vmatprep.subr.bf16.mxu0 %v1162
        %1329 = vmatpush1.bf16.msra.mxu0 %v1161
        %1330 = vmatprep.subr.bf16.mxu0 %v1166
        %1331 = vmatpush1.bf16.msra.mxu0 %v1165
        %1332 = vmatprep.subr.bf16.mxu0 %v1170
        %1333 = vmatpush1.bf16.msra.mxu0 %v1169
        %1334 = vmatprep.subr.bf16.mxu0 %v1174
        %1335 = vmatpush1.bf16.msra.mxu0 %v1173
        %1336 = vmatprep.subr.bf16.mxu0 %v1178
        %1337 = vmatpush1.bf16.msra.mxu0 %v1177
        %1338 = vmatprep.subr.bf16.mxu0 %v1182
        %1339 = vmatpush1.bf16.msra.mxu0 %v1181
        %1340 = vmatprep.subr.bf16.mxu0 %v1186
        %1341 = vmatpush1.bf16.msra.mxu0 %v1185
        %1342 = vmatprep.subr.bf16.mxu0 %v1190
        %1343 = vmatpush1.bf16.msra.mxu0 %v1189
        %1344 = vmatprep.subr.bf16.mxu0 %v1194
        %1345 = vmatpush1.bf16.msra.mxu0 %v1193
        %1346 = vmatprep.subr.bf16.mxu0 %v1198
        %1347 = vmatpush1.bf16.msra.mxu0 %v1197
        %1348 = vmatprep.subr.bf16.mxu0 %v1202
        %1349 = vmatpush1.bf16.msra.mxu0 %v1201
        %1350 = vmatprep.subr.bf16.mxu0 %v1206
        %1351 = vmatpush1.bf16.msra.mxu0 %v1205
        %1352 = vmatprep.subr.bf16.mxu0 %v1210
        %1353 = vmatpush1.bf16.msra.mxu0 %v1209
        %1354 = vmatprep.subr.bf16.mxu0 %v1214
        %1355 = vmatpush1.bf16.msra.mxu0 %v1213
        %1356 = vmatprep.subr.bf16.mxu0 %v1218
        %1357 = vmatpush1.bf16.msra.mxu0 %v1217
        %1358 = vmatprep.subr.bf16.mxu0 %v1222
        %1359 = vmatpush1.bf16.msra.mxu0 %v1221
        %1360 = vmatprep.mubr.bf16.mxu0 %v288
        %1361 = vmatmul.mubr.bf16.gmra.mrb[0].mxu0 %v287
        %v1362 = vpop.f32.mrb[0].mxu0
        %v1363 = vadd.f32 %v958, %v1362
        %v1364 = vpop.f32.mrb[0].mxu0
        %v1365 = vadd.f32 %v962, %v1364
        %v1366 = vpop.f32.mrb[0].mxu0
        %v1367 = vpop.f32.mrb[0].mxu0
        %1368 = vdwg.mxu0
        %v1369 = vpack.c.bf16 %v1322, %v1322
        %v1370 = vpack.c.bf16 %v1324, %v1324
        %v1371 = vpack.c.bf16 %v1363, %v1363
        %v1372 = vpack.c.bf16 %v1365, %v1365
        %v1373 = vmul.bf16 %v1369, 1071267802
        %v1374 = vmul.bf16 %v1370, 1071267802
        %v1375 = vmul.bf16 %v1371, 1071267802
        %v1376 = vmul.bf16 %v1372, 1071267802
        %v1377 = vxor.u32 %v1373, 2147516416
        %v1378 = vxor.u32 %v1374, 2147516416
        %v1379 = vxor.u32 %v1375, 2147516416
        %v1380 = vxor.u32 %v1376, 2147516416
        %v1382 = vmul.bf16 %v1377, 1069105081
        %v1383 = vpow.bf16.pop %v1382
        %v1385 = vmul.bf16 %v1378, 1069105081
        %v1386 = vpow.bf16.pop %v1385
        %v1388 = vmul.bf16 %v1379, 1069105081
        %v1389 = vpow.bf16.pop %v1388
        %v1391 = vmul.bf16 %v1380, 1069105081
        %v1392 = vpow.bf16.pop %v1391
        %v1393 = vadd.bf16 %v1383, 1065369472
        %v1394 = vadd.bf16 %v1386, 1065369472
        %v1395 = vadd.bf16 %v1389, 1065369472
        %v1396 = vadd.bf16 %v1392, 1065369472
        %v1397 = vrcp.bf16.pop %v1393
        %v1398 = vmul.bf16 1065369472, %v1397
        %v1399 = vrcp.bf16.pop %v1394
        %v1400 = vmul.bf16 1065369472, %v1399
        %v1401 = vrcp.bf16.pop %v1395
        %v1402 = vmul.bf16 1065369472, %v1401
        %v1403 = vrcp.bf16.pop %v1396
        %v1404 = vmul.bf16 1065369472, %v1403
        %v1405 = vmul.bf16 %v1369, %v1398
        %v1406 = vmul.bf16 %v1370, %v1400
        %v1407 = vmul.bf16 %v1371, %v1402
        %v1408 = vmul.bf16 %v1372, %v1404
        %v1409 = vld [vmem:[#allocation8 + $0x200] sm:$0xff]
        %v1410 = vld [vmem:[#allocation8 + $0x208] sm:$0xff]
        %v1411 = vld [vmem:[#allocation8 + $0x210] sm:$0xff]
        %v1412 = vld [vmem:[#allocation8 + $0x218] sm:$0xff]
        %v1413 = vld [vmem:[#allocation8 + $0x220] sm:$0xff]
        %v1414 = vld [vmem:[#allocation8 + $0x228] sm:$0xff]
        %v1415 = vld [vmem:[#allocation8 + $0x230] sm:$0xff]
        %v1416 = vld [vmem:[#allocation8 + $0x238] sm:$0xff]
        %v1417 = vld [vmem:[#allocation8 + $0x240] sm:$0xff]
        %v1418 = vld [vmem:[#allocation8 + $0x248] sm:$0xff]
        %v1419 = vld [vmem:[#allocation8 + $0x250] sm:$0xff]
        %v1420 = vld [vmem:[#allocation8 + $0x258] sm:$0xff]
        %v1421 = vld [vmem:[#allocation8 + $0x260] sm:$0xff]
        %v1422 = vld [vmem:[#allocation8 + $0x268] sm:$0xff]
        %v1423 = vld [vmem:[#allocation8 + $0x270] sm:$0xff]
        %v1424 = vld [vmem:[#allocation8 + $0x278] sm:$0xff]
        %v1425 = vld [vmem:[#allocation8 + $0x280] sm:$0xff]
        %v1426 = vld [vmem:[#allocation8 + $0x288] sm:$0xff]
        %v1427 = vld [vmem:[#allocation8 + $0x290] sm:$0xff]
        %v1428 = vld [vmem:[#allocation8 + $0x298] sm:$0xff]
        %v1429 = vld [vmem:[#allocation8 + $0x2a0] sm:$0xff]
        %v1430 = vld [vmem:[#allocation8 + $0x2a8] sm:$0xff]
        %v1431 = vld [vmem:[#allocation8 + $0x2b0] sm:$0xff]
        %v1432 = vld [vmem:[#allocation8 + $0x2b8] sm:$0xff]
        %v1433 = vld [vmem:[#allocation8 + $0x2c0] sm:$0xff]
        %v1434 = vld [vmem:[#allocation8 + $0x2c8] sm:$0xff]
        %v1435 = vld [vmem:[#allocation8 + $0x2d0] sm:$0xff]
        %v1436 = vld [vmem:[#allocation8 + $0x2d8] sm:$0xff]
        %v1437 = vld [vmem:[#allocation8 + $0x2e0] sm:$0xff]
        %v1438 = vld [vmem:[#allocation8 + $0x2e8] sm:$0xff]
        %v1439 = vld [vmem:[#allocation8 + $0x2f0] sm:$0xff]
        %v1440 = vld [vmem:[#allocation8 + $0x2f8] sm:$0xff]
        %v1441 = vld [vmem:[#allocation8 + $0x300] sm:$0xff]
        %v1442 = vld [vmem:[#allocation8 + $0x308] sm:$0xff]
        %v1443 = vld [vmem:[#allocation8 + $0x310] sm:$0xff]
        %v1444 = vld [vmem:[#allocation8 + $0x318] sm:$0xff]
        %v1445 = vld [vmem:[#allocation8 + $0x320] sm:$0xff]
        %v1446 = vld [vmem:[#allocation8 + $0x328] sm:$0xff]
        %v1447 = vld [vmem:[#allocation8 + $0x330] sm:$0xff]
        %v1448 = vld [vmem:[#allocation8 + $0x338] sm:$0xff]
        %v1449 = vld [vmem:[#allocation8 + $0x340] sm:$0xff]
        %v1450 = vld [vmem:[#allocation8 + $0x348] sm:$0xff]
        %v1451 = vld [vmem:[#allocation8 + $0x350] sm:$0xff]
        %v1452 = vld [vmem:[#allocation8 + $0x358] sm:$0xff]
        %v1453 = vld [vmem:[#allocation8 + $0x360] sm:$0xff]
        %v1454 = vld [vmem:[#allocation8 + $0x368] sm:$0xff]
        %v1455 = vld [vmem:[#allocation8 + $0x370] sm:$0xff]
        %v1456 = vld [vmem:[#allocation8 + $0x378] sm:$0xff]
        %v1457 = vld [vmem:[#allocation8 + $0x380] sm:$0xff]
        %v1458 = vld [vmem:[#allocation8 + $0x388] sm:$0xff]
        %v1459 = vld [vmem:[#allocation8 + $0x390] sm:$0xff]
        %v1460 = vld [vmem:[#allocation8 + $0x398] sm:$0xff]
        %v1461 = vld [vmem:[#allocation8 + $0x3a0] sm:$0xff]
        %v1462 = vld [vmem:[#allocation8 + $0x3a8] sm:$0xff]
        %v1463 = vld [vmem:[#allocation8 + $0x3b0] sm:$0xff]
        %v1464 = vld [vmem:[#allocation8 + $0x3b8] sm:$0xff]
        %v1465 = vld [vmem:[#allocation8 + $0x3c0] sm:$0xff]
        %v1466 = vld [vmem:[#allocation8 + $0x3c8] sm:$0xff]
        %v1467 = vld [vmem:[#allocation8 + $0x3d0] sm:$0xff]
        %v1468 = vld [vmem:[#allocation8 + $0x3d8] sm:$0xff]
        %v1469 = vld [vmem:[#allocation8 + $0x3e0] sm:$0xff]
        %v1470 = vld [vmem:[#allocation8 + $0x3e8] sm:$0xff]
        %v1471 = vld [vmem:[#allocation8 + $0x3f0] sm:$0xff]
        %v1472 = vld [vmem:[#allocation8 + $0x3f8] sm:$0xff]
        %v1537 = vunpack.c.l.b16 %v1409
        %v1538 = vunpack.c.h.b16 %v1409
        %v1539 = vunpack.c.l.b16 %v1410
        %v1540 = vunpack.c.h.b16 %v1410
        %v1541 = vunpack.c.l.b16 %v1411
        %v1542 = vunpack.c.h.b16 %v1411
        %v1543 = vunpack.c.l.b16 %v1412
        %v1544 = vunpack.c.h.b16 %v1412
        %v1545 = vunpack.c.l.b16 %v1413
        %v1546 = vunpack.c.h.b16 %v1413
        %v1547 = vunpack.c.l.b16 %v1414
        %v1548 = vunpack.c.h.b16 %v1414
        %v1549 = vunpack.c.l.b16 %v1415
        %v1550 = vunpack.c.h.b16 %v1415
        %v1551 = vunpack.c.l.b16 %v1416
        %v1552 = vunpack.c.h.b16 %v1416
        %v1553 = vunpack.c.l.b16 %v1417
        %v1554 = vunpack.c.h.b16 %v1417
        %v1555 = vunpack.c.l.b16 %v1418
        %v1556 = vunpack.c.h.b16 %v1418
        %v1557 = vunpack.c.l.b16 %v1419
        %v1558 = vunpack.c.h.b16 %v1419
        %v1559 = vunpack.c.l.b16 %v1420
        %v1560 = vunpack.c.h.b16 %v1420
        %v1561 = vunpack.c.l.b16 %v1421
        %v1562 = vunpack.c.h.b16 %v1421
        %v1563 = vunpack.c.l.b16 %v1422
        %v1564 = vunpack.c.h.b16 %v1422
        %v1565 = vunpack.c.l.b16 %v1423
        %v1566 = vunpack.c.h.b16 %v1423
        %v1567 = vunpack.c.l.b16 %v1424
        %v1568 = vunpack.c.h.b16 %v1424
        %v1569 = vunpack.c.l.b16 %v1425
        %v1570 = vunpack.c.h.b16 %v1425
        %v1571 = vunpack.c.l.b16 %v1426
        %v1572 = vunpack.c.h.b16 %v1426
        %v1573 = vunpack.c.l.b16 %v1427
        %v1574 = vunpack.c.h.b16 %v1427
        %v1575 = vunpack.c.l.b16 %v1428
        %v1576 = vunpack.c.h.b16 %v1428
        %v1577 = vunpack.c.l.b16 %v1429
        %v1578 = vunpack.c.h.b16 %v1429
        %v1579 = vunpack.c.l.b16 %v1430
        %v1580 = vunpack.c.h.b16 %v1430
        %v1581 = vunpack.c.l.b16 %v1431
        %v1582 = vunpack.c.h.b16 %v1431
        %v1583 = vunpack.c.l.b16 %v1432
        %v1584 = vunpack.c.h.b16 %v1432
        %v1585 = vunpack.c.l.b16 %v1433
        %v1586 = vunpack.c.h.b16 %v1433
        %v1587 = vunpack.c.l.b16 %v1434
        %v1588 = vunpack.c.h.b16 %v1434
        %v1589 = vunpack.c.l.b16 %v1435
        %v1590 = vunpack.c.h.b16 %v1435
        %v1591 = vunpack.c.l.b16 %v1436
        %v1592 = vunpack.c.h.b16 %v1436
        %v1593 = vunpack.c.l.b16 %v1437
        %v1594 = vunpack.c.h.b16 %v1437
        %v1595 = vunpack.c.l.b16 %v1438
        %v1596 = vunpack.c.h.b16 %v1438
        %v1597 = vunpack.c.l.b16 %v1439
        %v1598 = vunpack.c.h.b16 %v1439
        %v1599 = vunpack.c.l.b16 %v1440
        %v1600 = vunpack.c.h.b16 %v1440
        %v1601 = vunpack.c.l.b16 %v1441
        %v1602 = vunpack.c.h.b16 %v1441
        %v1603 = vunpack.c.l.b16 %v1442
        %v1604 = vunpack.c.h.b16 %v1442
        %v1605 = vunpack.c.l.b16 %v1443
        %v1606 = vunpack.c.h.b16 %v1443
        %v1607 = vunpack.c.l.b16 %v1444
        %v1608 = vunpack.c.h.b16 %v1444
        %v1609 = vunpack.c.l.b16 %v1445
        %v1610 = vunpack.c.h.b16 %v1445
        %v1611 = vunpack.c.l.b16 %v1446
        %v1612 = vunpack.c.h.b16 %v1446
        %v1613 = vunpack.c.l.b16 %v1447
        %v1614 = vunpack.c.h.b16 %v1447
        %v1615 = vunpack.c.l.b16 %v1448
        %v1616 = vunpack.c.h.b16 %v1448
        %v1617 = vunpack.c.l.b16 %v1449
        %v1618 = vunpack.c.h.b16 %v1449
        %v1619 = vunpack.c.l.b16 %v1450
        %v1620 = vunpack.c.h.b16 %v1450
        %v1621 = vunpack.c.l.b16 %v1451
        %v1622 = vunpack.c.h.b16 %v1451
        %v1623 = vunpack.c.l.b16 %v1452
        %v1624 = vunpack.c.h.b16 %v1452
        %v1625 = vunpack.c.l.b16 %v1453
        %v1626 = vunpack.c.h.b16 %v1453
        %v1627 = vunpack.c.l.b16 %v1454
        %v1628 = vunpack.c.h.b16 %v1454
        %v1629 = vunpack.c.l.b16 %v1455
        %v1630 = vunpack.c.h.b16 %v1455
        %v1631 = vunpack.c.l.b16 %v1456
        %v1632 = vunpack.c.h.b16 %v1456
        %v1633 = vunpack.c.l.b16 %v1457
        %v1634 = vunpack.c.h.b16 %v1457
        %v1635 = vunpack.c.l.b16 %v1458
        %v1636 = vunpack.c.h.b16 %v1458
        %v1637 = vunpack.c.l.b16 %v1459
        %v1638 = vunpack.c.h.b16 %v1459
        %v1639 = vunpack.c.l.b16 %v1460
        %v1640 = vunpack.c.h.b16 %v1460
        %v1641 = vunpack.c.l.b16 %v1461
        %v1642 = vunpack.c.h.b16 %v1461
        %v1643 = vunpack.c.l.b16 %v1462
        %v1644 = vunpack.c.h.b16 %v1462
        %v1645 = vunpack.c.l.b16 %v1463
        %v1646 = vunpack.c.h.b16 %v1463
        %v1647 = vunpack.c.l.b16 %v1464
        %v1648 = vunpack.c.h.b16 %v1464
        %v1649 = vunpack.c.l.b16 %v1465
        %v1650 = vunpack.c.h.b16 %v1465
        %v1651 = vunpack.c.l.b16 %v1466
        %v1652 = vunpack.c.h.b16 %v1466
        %v1653 = vunpack.c.l.b16 %v1467
        %v1654 = vunpack.c.h.b16 %v1467
        %v1655 = vunpack.c.l.b16 %v1468
        %v1656 = vunpack.c.h.b16 %v1468
        %v1657 = vunpack.c.l.b16 %v1469
        %v1658 = vunpack.c.h.b16 %v1469
        %v1659 = vunpack.c.l.b16 %v1470
        %v1660 = vunpack.c.h.b16 %v1470
        %v1661 = vunpack.c.l.b16 %v1471
        %v1662 = vunpack.c.h.b16 %v1471
        %v1663 = vunpack.c.l.b16 %v1472
        %v1664 = vunpack.c.h.b16 %v1472
        %v1665 = vpack.c.b16 %v1539, %v1537
        %v1666 = vpack.c.b16 %v1540, %v1538
        %v1667 = vpack.c.b16 %v1543, %v1541
        %v1668 = vpack.c.b16 %v1544, %v1542
        %v1669 = vpack.c.b16 %v1547, %v1545
        %v1670 = vpack.c.b16 %v1548, %v1546
        %v1671 = vpack.c.b16 %v1551, %v1549
        %v1672 = vpack.c.b16 %v1552, %v1550
        %v1673 = vpack.c.b16 %v1555, %v1553
        %v1674 = vpack.c.b16 %v1556, %v1554
        %v1675 = vpack.c.b16 %v1559, %v1557
        %v1676 = vpack.c.b16 %v1560, %v1558
        %v1677 = vpack.c.b16 %v1563, %v1561
        %v1678 = vpack.c.b16 %v1564, %v1562
        %v1679 = vpack.c.b16 %v1567, %v1565
        %v1680 = vpack.c.b16 %v1568, %v1566
        %v1681 = vpack.c.b16 %v1571, %v1569
        %v1682 = vpack.c.b16 %v1572, %v1570
        %v1683 = vpack.c.b16 %v1575, %v1573
        %v1684 = vpack.c.b16 %v1576, %v1574
        %v1685 = vpack.c.b16 %v1579, %v1577
        %v1686 = vpack.c.b16 %v1580, %v1578
        %v1687 = vpack.c.b16 %v1583, %v1581
        %v1688 = vpack.c.b16 %v1584, %v1582
        %v1689 = vpack.c.b16 %v1587, %v1585
        %v1690 = vpack.c.b16 %v1588, %v1586
        %v1691 = vpack.c.b16 %v1591, %v1589
        %v1692 = vpack.c.b16 %v1592, %v1590
        %v1693 = vpack.c.b16 %v1595, %v1593
        %v1694 = vpack.c.b16 %v1596, %v1594
        %v1695 = vpack.c.b16 %v1599, %v1597
        %v1696 = vpack.c.b16 %v1600, %v1598
        %v1697 = vpack.c.b16 %v1603, %v1601
        %v1698 = vpack.c.b16 %v1604, %v1602
        %v1699 = vpack.c.b16 %v1607, %v1605
        %v1700 = vpack.c.b16 %v1608, %v1606
        %v1701 = vpack.c.b16 %v1611, %v1609
        %v1702 = vpack.c.b16 %v1612, %v1610
        %v1703 = vpack.c.b16 %v1615, %v1613
        %v1704 = vpack.c.b16 %v1616, %v1614
        %v1705 = vpack.c.b16 %v1619, %v1617
        %v1706 = vpack.c.b16 %v1620, %v1618
        %v1707 = vpack.c.b16 %v1623, %v1621
        %v1708 = vpack.c.b16 %v1624, %v1622
        %v1709 = vpack.c.b16 %v1627, %v1625
        %v1710 = vpack.c.b16 %v1628, %v1626
        %v1711 = vpack.c.b16 %v1631, %v1629
        %v1712 = vpack.c.b16 %v1632, %v1630
        %v1713 = vpack.c.b16 %v1635, %v1633
        %v1714 = vpack.c.b16 %v1636, %v1634
        %v1715 = vpack.c.b16 %v1639, %v1637
        %v1716 = vpack.c.b16 %v1640, %v1638
        %v1717 = vpack.c.b16 %v1643, %v1641
        %v1718 = vpack.c.b16 %v1644, %v1642
        %v1719 = vpack.c.b16 %v1647, %v1645
        %v1720 = vpack.c.b16 %v1648, %v1646
        %v1721 = vpack.c.b16 %v1651, %v1649
        %v1722 = vpack.c.b16 %v1652, %v1650
        %v1723 = vpack.c.b16 %v1655, %v1653
        %v1724 = vpack.c.b16 %v1656, %v1654
        %v1725 = vpack.c.b16 %v1659, %v1657
        %v1726 = vpack.c.b16 %v1660, %v1658
        %v1727 = vpack.c.b16 %v1663, %v1661
        %v1728 = vpack.c.b16 %v1664, %v1662
        %1793 = vmatprep.subr.bf16.mxu0 %v1666
        %1794 = vmatpush1.bf16.msra.mxu0 %v1665
        %1795 = vmatprep.subr.bf16.mxu0 %v1668
        %1796 = vmatpush1.bf16.msra.mxu0 %v1667
        %1797 = vmatprep.subr.bf16.mxu0 %v1670
        %1798 = vmatpush1.bf16.msra.mxu0 %v1669
        %1799 = vmatprep.subr.bf16.mxu0 %v1672
        %1800 = vmatpush1.bf16.msra.mxu0 %v1671
        %1801 = vmatprep.subr.bf16.mxu0 %v1674
        %1802 = vmatpush1.bf16.msra.mxu0 %v1673
        %1803 = vmatprep.subr.bf16.mxu0 %v1676
        %1804 = vmatpush1.bf16.msra.mxu0 %v1675
        %1805 = vmatprep.subr.bf16.mxu0 %v1678
        %1806 = vmatpush1.bf16.msra.mxu0 %v1677
        %1807 = vmatprep.subr.bf16.mxu0 %v1680
        %1808 = vmatpush1.bf16.msra.mxu0 %v1679
        %1809 = vmatprep.subr.bf16.mxu0 %v1682
        %1810 = vmatpush1.bf16.msra.mxu0 %v1681
        %1811 = vmatprep.subr.bf16.mxu0 %v1684
        %1812 = vmatpush1.bf16.msra.mxu0 %v1683
        %1813 = vmatprep.subr.bf16.mxu0 %v1686
        %1814 = vmatpush1.bf16.msra.mxu0 %v1685
        %1815 = vmatprep.subr.bf16.mxu0 %v1688
        %1816 = vmatpush1.bf16.msra.mxu0 %v1687
        %1817 = vmatprep.subr.bf16.mxu0 %v1690
        %1818 = vmatpush1.bf16.msra.mxu0 %v1689
        %1819 = vmatprep.subr.bf16.mxu0 %v1692
        %1820 = vmatpush1.bf16.msra.mxu0 %v1691
        %1821 = vmatprep.subr.bf16.mxu0 %v1694
        %1822 = vmatpush1.bf16.msra.mxu0 %v1693
        %1823 = vmatprep.subr.bf16.mxu0 %v1696
        %1824 = vmatpush1.bf16.msra.mxu0 %v1695
        %1825 = vmatprep.mubr.bf16.mxu0 %v1406
        %1826 = vmatmul.mubr.bf16.gmra.mrb[0].mxu0 %v1405
        %v1827 = vpop.f32.mrb[0].mxu0
        %v1828 = vadd.f32 0.0, %v1827
        %v1829 = vpop.f32.mrb[0].mxu0
        %v1830 = vadd.f32 0.0, %v1829
        %v1831 = vpop.f32.mrb[0].mxu0
        %v1832 = vpop.f32.mrb[0].mxu0
        %1833 = vdwg.mxu0
        %1834 = vmatprep.subr.bf16.mxu0 %v1698
        %1835 = vmatpush1.bf16.msra.mxu0 %v1697
        %1836 = vmatprep.subr.bf16.mxu0 %v1700
        %1837 = vmatpush1.bf16.msra.mxu0 %v1699
        %1838 = vmatprep.subr.bf16.mxu0 %v1702
        %1839 = vmatpush1.bf16.msra.mxu0 %v1701
        %1840 = vmatprep.subr.bf16.mxu0 %v1704
        %1841 = vmatpush1.bf16.msra.mxu0 %v1703
        %1842 = vmatprep.subr.bf16.mxu0 %v1706
        %1843 = vmatpush1.bf16.msra.mxu0 %v1705
        %1844 = vmatprep.subr.bf16.mxu0 %v1708
        %1845 = vmatpush1.bf16.msra.mxu0 %v1707
        %1846 = vmatprep.subr.bf16.mxu0 %v1710
        %1847 = vmatpush1.bf16.msra.mxu0 %v1709
        %1848 = vmatprep.subr.bf16.mxu0 %v1712
        %1849 = vmatpush1.bf16.msra.mxu0 %v1711
        %1850 = vmatprep.subr.bf16.mxu0 %v1714
        %1851 = vmatpush1.bf16.msra.mxu0 %v1713
        %1852 = vmatprep.subr.bf16.mxu0 %v1716
        %1853 = vmatpush1.bf16.msra.mxu0 %v1715
        %1854 = vmatprep.subr.bf16.mxu0 %v1718
        %1855 = vmatpush1.bf16.msra.mxu0 %v1717
        %1856 = vmatprep.subr.bf16.mxu0 %v1720
        %1857 = vmatpush1.bf16.msra.mxu0 %v1719
        %1858 = vmatprep.subr.bf16.mxu0 %v1722
        %1859 = vmatpush1.bf16.msra.mxu0 %v1721
        %1860 = vmatprep.subr.bf16.mxu0 %v1724
        %1861 = vmatpush1.bf16.msra.mxu0 %v1723
        %1862 = vmatprep.subr.bf16.mxu0 %v1726
        %1863 = vmatpush1.bf16.msra.mxu0 %v1725
        %1864 = vmatprep.subr.bf16.mxu0 %v1728
        %1865 = vmatpush1.bf16.msra.mxu0 %v1727
        %1866 = vmatprep.mubr.bf16.mxu0 %v1408
        %1867 = vmatmul.mubr.bf16.gmra.mrb[0].mxu0 %v1407
        %v1868 = vpop.f32.mrb[0].mxu0
        %v1869 = vadd.f32 %v1828, %v1868
        %v1870 = vpop.f32.mrb[0].mxu0
        %v1871 = vadd.f32 %v1830, %v1870
        %v1872 = vpop.f32.mrb[0].mxu0
        %v1873 = vpop.f32.mrb[0].mxu0
        %1874 = vdwg.mxu0
        %v1939 = vunpack.c.l.b16 %v817
        %v1940 = vunpack.c.h.b16 %v817
        %v1941 = vunpack.c.l.b16 %v818
        %v1942 = vunpack.c.h.b16 %v818
        %v1943 = vunpack.c.l.b16 %v819
        %v1944 = vunpack.c.h.b16 %v819
        %v1945 = vunpack.c.l.b16 %v820
        %v1946 = vunpack.c.h.b16 %v820
        %v1947 = vunpack.c.l.b16 %v821
        %v1948 = vunpack.c.h.b16 %v821
        %v1949 = vunpack.c.l.b16 %v822
        %v1950 = vunpack.c.h.b16 %v822
        %v1951 = vunpack.c.l.b16 %v823
        %v1952 = vunpack.c.h.b16 %v823
        %v1953 = vunpack.c.l.b16 %v824
        %v1954 = vunpack.c.h.b16 %v824
        %v1955 = vunpack.c.l.b16 %v825
        %v1956 = vunpack.c.h.b16 %v825
        %v1957 = vunpack.c.l.b16 %v826
        %v1958 = vunpack.c.h.b16 %v826
        %v1959 = vunpack.c.l.b16 %v827
        %v1960 = vunpack.c.h.b16 %v827
        %v1961 = vunpack.c.l.b16 %v828
        %v1962 = vunpack.c.h.b16 %v828
        %v1963 = vunpack.c.l.b16 %v829
        %v1964 = vunpack.c.h.b16 %v829
        %v1965 = vunpack.c.l.b16 %v830
        %v1966 = vunpack.c.h.b16 %v830
        %v1967 = vunpack.c.l.b16 %v831
        %v1968 = vunpack.c.h.b16 %v831
        %v1969 = vunpack.c.l.b16 %v832
        %v1970 = vunpack.c.h.b16 %v832
        %v1971 = vunpack.c.l.b16 %v833
        %v1972 = vunpack.c.h.b16 %v833
        %v1973 = vunpack.c.l.b16 %v834
        %v1974 = vunpack.c.h.b16 %v834
        %v1975 = vunpack.c.l.b16 %v835
        %v1976 = vunpack.c.h.b16 %v835
        %v1977 = vunpack.c.l.b16 %v836
        %v1978 = vunpack.c.h.b16 %v836
        %v1979 = vunpack.c.l.b16 %v837
        %v1980 = vunpack.c.h.b16 %v837
        %v1981 = vunpack.c.l.b16 %v838
        %v1982 = vunpack.c.h.b16 %v838
        %v1983 = vunpack.c.l.b16 %v839
        %v1984 = vunpack.c.h.b16 %v839
        %v1985 = vunpack.c.l.b16 %v840
        %v1986 = vunpack.c.h.b16 %v840
        %v1987 = vunpack.c.l.b16 %v841
        %v1988 = vunpack.c.h.b16 %v841
        %v1989 = vunpack.c.l.b16 %v842
        %v1990 = vunpack.c.h.b16 %v842
        %v1991 = vunpack.c.l.b16 %v843
        %v1992 = vunpack.c.h.b16 %v843
        %v1993 = vunpack.c.l.b16 %v844
        %v1994 = vunpack.c.h.b16 %v844
        %v1995 = vunpack.c.l.b16 %v845
        %v1996 = vunpack.c.h.b16 %v845
        %v1997 = vunpack.c.l.b16 %v846
        %v1998 = vunpack.c.h.b16 %v846
        %v1999 = vunpack.c.l.b16 %v847
        %v2000 = vunpack.c.h.b16 %v847
        %v2001 = vunpack.c.l.b16 %v848
        %v2002 = vunpack.c.h.b16 %v848
        %v2003 = vunpack.c.l.b16 %v849
        %v2004 = vunpack.c.h.b16 %v849
        %v2005 = vunpack.c.l.b16 %v850
        %v2006 = vunpack.c.h.b16 %v850
        %v2007 = vunpack.c.l.b16 %v851
        %v2008 = vunpack.c.h.b16 %v851
        %v2009 = vunpack.c.l.b16 %v852
        %v2010 = vunpack.c.h.b16 %v852
        %v2011 = vunpack.c.l.b16 %v853
        %v2012 = vunpack.c.h.b16 %v853
        %v2013 = vunpack.c.l.b16 %v854
        %v2014 = vunpack.c.h.b16 %v854
        %v2015 = vunpack.c.l.b16 %v855
        %v2016 = vunpack.c.h.b16 %v855
        %v2017 = vunpack.c.l.b16 %v856
        %v2018 = vunpack.c.h.b16 %v856
        %v2019 = vunpack.c.l.b16 %v857
        %v2020 = vunpack.c.h.b16 %v857
        %v2021 = vunpack.c.l.b16 %v858
        %v2022 = vunpack.c.h.b16 %v858
        %v2023 = vunpack.c.l.b16 %v859
        %v2024 = vunpack.c.h.b16 %v859
        %v2025 = vunpack.c.l.b16 %v860
        %v2026 = vunpack.c.h.b16 %v860
        %v2027 = vunpack.c.l.b16 %v861
        %v2028 = vunpack.c.h.b16 %v861
        %v2029 = vunpack.c.l.b16 %v862
        %v2030 = vunpack.c.h.b16 %v862
        %v2031 = vunpack.c.l.b16 %v863
        %v2032 = vunpack.c.h.b16 %v863
        %v2033 = vunpack.c.l.b16 %v864
        %v2034 = vunpack.c.h.b16 %v864
        %v2035 = vunpack.c.l.b16 %v865
        %v2036 = vunpack.c.h.b16 %v865
        %v2037 = vunpack.c.l.b16 %v866
        %v2038 = vunpack.c.h.b16 %v866
        %v2039 = vunpack.c.l.b16 %v867
        %v2040 = vunpack.c.h.b16 %v867
        %v2041 = vunpack.c.l.b16 %v868
        %v2042 = vunpack.c.h.b16 %v868
        %v2043 = vunpack.c.l.b16 %v869
        %v2044 = vunpack.c.h.b16 %v869
        %v2045 = vunpack.c.l.b16 %v870
        %v2046 = vunpack.c.h.b16 %v870
        %v2047 = vunpack.c.l.b16 %v871
        %v2048 = vunpack.c.h.b16 %v871
        %v2049 = vunpack.c.l.b16 %v872
        %v2050 = vunpack.c.h.b16 %v872
        %v2051 = vunpack.c.l.b16 %v873
        %v2052 = vunpack.c.h.b16 %v873
        %v2053 = vunpack.c.l.b16 %v874
        %v2054 = vunpack.c.h.b16 %v874
        %v2055 = vunpack.c.l.b16 %v875
        %v2056 = vunpack.c.h.b16 %v875
        %v2057 = vunpack.c.l.b16 %v876
        %v2058 = vunpack.c.h.b16 %v876
        %v2059 = vunpack.c.l.b16 %v877
        %v2060 = vunpack.c.h.b16 %v877
        %v2061 = vunpack.c.l.b16 %v878
        %v2062 = vunpack.c.h.b16 %v878
        %v2063 = vunpack.c.l.b16 %v879
        %v2064 = vunpack.c.h.b16 %v879
        %v2065 = vunpack.c.l.b16 %v880
        %v2066 = vunpack.c.h.b16 %v880
        %v2067 = vpack.c.b16 %v1941, %v1939
        %v2068 = vpack.c.b16 %v1942, %v1940
        %v2069 = vpack.c.b16 %v1945, %v1943
        %v2070 = vpack.c.b16 %v1946, %v1944
        %v2071 = vpack.c.b16 %v1949, %v1947
        %v2072 = vpack.c.b16 %v1950, %v1948
        %v2073 = vpack.c.b16 %v1953, %v1951
        %v2074 = vpack.c.b16 %v1954, %v1952
        %v2075 = vpack.c.b16 %v1957, %v1955
        %v2076 = vpack.c.b16 %v1958, %v1956
        %v2077 = vpack.c.b16 %v1961, %v1959
        %v2078 = vpack.c.b16 %v1962, %v1960
        %v2079 = vpack.c.b16 %v1965, %v1963
        %v2080 = vpack.c.b16 %v1966, %v1964
        %v2081 = vpack.c.b16 %v1969, %v1967
        %v2082 = vpack.c.b16 %v1970, %v1968
        %v2083 = vpack.c.b16 %v1973, %v1971
        %v2084 = vpack.c.b16 %v1974, %v1972
        %v2085 = vpack.c.b16 %v1977, %v1975
        %v2086 = vpack.c.b16 %v1978, %v1976
        %v2087 = vpack.c.b16 %v1981, %v1979
        %v2088 = vpack.c.b16 %v1982, %v1980
        %v2089 = vpack.c.b16 %v1985, %v1983
        %v2090 = vpack.c.b16 %v1986, %v1984
        %v2091 = vpack.c.b16 %v1989, %v1987
        %v2092 = vpack.c.b16 %v1990, %v1988
        %v2093 = vpack.c.b16 %v1993, %v1991
        %v2094 = vpack.c.b16 %v1994, %v1992
        %v2095 = vpack.c.b16 %v1997, %v1995
        %v2096 = vpack.c.b16 %v1998, %v1996
        %v2097 = vpack.c.b16 %v2001, %v1999
        %v2098 = vpack.c.b16 %v2002, %v2000
        %v2099 = vpack.c.b16 %v2005, %v2003
        %v2100 = vpack.c.b16 %v2006, %v2004
        %v2101 = vpack.c.b16 %v2009, %v2007
        %v2102 = vpack.c.b16 %v2010, %v2008
        %v2103 = vpack.c.b16 %v2013, %v2011
        %v2104 = vpack.c.b16 %v2014, %v2012
        %v2105 = vpack.c.b16 %v2017, %v2015
        %v2106 = vpack.c.b16 %v2018, %v2016
        %v2107 = vpack.c.b16 %v2021, %v2019
        %v2108 = vpack.c.b16 %v2022, %v2020
        %v2109 = vpack.c.b16 %v2025, %v2023
        %v2110 = vpack.c.b16 %v2026, %v2024
        %v2111 = vpack.c.b16 %v2029, %v2027
        %v2112 = vpack.c.b16 %v2030, %v2028
        %v2113 = vpack.c.b16 %v2033, %v2031
        %v2114 = vpack.c.b16 %v2034, %v2032
        %v2115 = vpack.c.b16 %v2037, %v2035
        %v2116 = vpack.c.b16 %v2038, %v2036
        %v2117 = vpack.c.b16 %v2041, %v2039
        %v2118 = vpack.c.b16 %v2042, %v2040
        %v2119 = vpack.c.b16 %v2045, %v2043
        %v2120 = vpack.c.b16 %v2046, %v2044
        %v2121 = vpack.c.b16 %v2049, %v2047
        %v2122 = vpack.c.b16 %v2050, %v2048
        %v2123 = vpack.c.b16 %v2053, %v2051
        %v2124 = vpack.c.b16 %v2054, %v2052
        %v2125 = vpack.c.b16 %v2057, %v2055
        %v2126 = vpack.c.b16 %v2058, %v2056
        %v2127 = vpack.c.b16 %v2061, %v2059
        %v2128 = vpack.c.b16 %v2062, %v2060
        %v2129 = vpack.c.b16 %v2065, %v2063
        %v2130 = vpack.c.b16 %v2066, %v2064
        %2195 = vmatprep.subr.bf16.mxu0 %v2068
        %2196 = vmatpush1.bf16.msra.mxu0 %v2067
        %2197 = vmatprep.subr.bf16.mxu0 %v2070
        %2198 = vmatpush1.bf16.msra.mxu0 %v2069
        %2199 = vmatprep.subr.bf16.mxu0 %v2072
        %2200 = vmatpush1.bf16.msra.mxu0 %v2071
        %2201 = vmatprep.subr.bf16.mxu0 %v2074
        %2202 = vmatpush1.bf16.msra.mxu0 %v2073
        %2203 = vmatprep.subr.bf16.mxu0 %v2076
        %2204 = vmatpush1.bf16.msra.mxu0 %v2075
        %2205 = vmatprep.subr.bf16.mxu0 %v2078
        %2206 = vmatpush1.bf16.msra.mxu0 %v2077
        %2207 = vmatprep.subr.bf16.mxu0 %v2080
        %2208 = vmatpush1.bf16.msra.mxu0 %v2079
        %2209 = vmatprep.subr.bf16.mxu0 %v2082
        %2210 = vmatpush1.bf16.msra.mxu0 %v2081
        %2211 = vmatprep.subr.bf16.mxu0 %v2084
        %2212 = vmatpush1.bf16.msra.mxu0 %v2083
        %2213 = vmatprep.subr.bf16.mxu0 %v2086
        %2214 = vmatpush1.bf16.msra.mxu0 %v2085
        %2215 = vmatprep.subr.bf16.mxu0 %v2088
        %2216 = vmatpush1.bf16.msra.mxu0 %v2087
        %2217 = vmatprep.subr.bf16.mxu0 %v2090
        %2218 = vmatpush1.bf16.msra.mxu0 %v2089
        %2219 = vmatprep.subr.bf16.mxu0 %v2092
        %2220 = vmatpush1.bf16.msra.mxu0 %v2091
        %2221 = vmatprep.subr.bf16.mxu0 %v2094
        %2222 = vmatpush1.bf16.msra.mxu0 %v2093
        %2223 = vmatprep.subr.bf16.mxu0 %v2096
        %2224 = vmatpush1.bf16.msra.mxu0 %v2095
        %2225 = vmatprep.subr.bf16.mxu0 %v2098
        %2226 = vmatpush1.bf16.msra.mxu0 %v2097
        %2227 = vmatprep.mubr.bf16.mxu0 %v814
        %2228 = vmatmul.mubr.bf16.gmra.mrb[0].mxu0 %v813
        %v2229 = vpop.f32.mrb[0].mxu0
        %v2230 = vadd.f32 %v1869, %v2229
        %v2231 = vpop.f32.mrb[0].mxu0
        %v2232 = vadd.f32 %v1871, %v2231
        %v2233 = vpop.f32.mrb[0].mxu0
        %v2234 = vpop.f32.mrb[0].mxu0
        %2235 = vdwg.mxu0
        %2236 = vmatprep.subr.bf16.mxu0 %v2100
        %2237 = vmatpush1.bf16.msra.mxu0 %v2099
        %2238 = vmatprep.subr.bf16.mxu0 %v2102
        %2239 = vmatpush1.bf16.msra.mxu0 %v2101
        %2240 = vmatprep.subr.bf16.mxu0 %v2104
        %2241 = vmatpush1.bf16.msra.mxu0 %v2103
        %2242 = vmatprep.subr.bf16.mxu0 %v2106
        %2243 = vmatpush1.bf16.msra.mxu0 %v2105
        %2244 = vmatprep.subr.bf16.mxu0 %v2108
        %2245 = vmatpush1.bf16.msra.mxu0 %v2107
        %2246 = vmatprep.subr.bf16.mxu0 %v2110
        %2247 = vmatpush1.bf16.msra.mxu0 %v2109
        %2248 = vmatprep.subr.bf16.mxu0 %v2112
        %2249 = vmatpush1.bf16.msra.mxu0 %v2111
        %2250 = vmatprep.subr.bf16.mxu0 %v2114
        %2251 = vmatpush1.bf16.msra.mxu0 %v2113
        %2252 = vmatprep.subr.bf16.mxu0 %v2116
        %2253 = vmatpush1.bf16.msra.mxu0 %v2115
        %2254 = vmatprep.subr.bf16.mxu0 %v2118
        %2255 = vmatpush1.bf16.msra.mxu0 %v2117
        %2256 = vmatprep.subr.bf16.mxu0 %v2120
        %2257 = vmatpush1.bf16.msra.mxu0 %v2119
        %2258 = vmatprep.subr.bf16.mxu0 %v2122
        %2259 = vmatpush1.bf16.msra.mxu0 %v2121
        %2260 = vmatprep.subr.bf16.mxu0 %v2124
        %2261 = vmatpush1.bf16.msra.mxu0 %v2123
        %2262 = vmatprep.subr.bf16.mxu0 %v2126
        %2263 = vmatpush1.bf16.msra.mxu0 %v2125
        %2264 = vmatprep.subr.bf16.mxu0 %v2128
        %2265 = vmatpush1.bf16.msra.mxu0 %v2127
        %2266 = vmatprep.subr.bf16.mxu0 %v2130
        %2267 = vmatpush1.bf16.msra.mxu0 %v2129
        %2268 = vmatprep.mubr.bf16.mxu0 %v816
        %2269 = vmatmul.mubr.bf16.gmra.mrb[0].mxu0 %v815
        %v2270 = vpop.f32.mrb[0].mxu0
        %v2271 = vadd.f32 %v2230, %v2270
        %v2272 = vpop.f32.mrb[0].mxu0
        %v2273 = vadd.f32 %v2232, %v2272
        %v2274 = vpop.f32.mrb[0].mxu0
        %v2275 = vpop.f32.mrb[0].mxu0
        %2276 = vdwg.mxu0
        %v2277 = vld [vmem:[%s4] sm:$0x3]
        %v2279 = vlaneseq
        %v2280 = vshrl.u32 %v2279, 7
        %v2281 = vsub.s32 0, %v2280
        %v2282 = vrot.slane %v2277, %v2281
        %v2283 = vlaneseq
        %v2284 = vshrl.u32 %v2283, 7
        %v2285 = vsub.s32 1, %v2284
        %v2286 = vrot.slane %v2277, %v2285
        %v2289 = vadd.f32 %v2271, %v2282
        %v2290 = vadd.f32 %v2273, %v2286
        %2291 = vst [vmem:[%s282] sm:$0xff] %v2289
        %2292 = vst [vmem:[%s282 + $0x8] sm:$0xff] %v2290
        %s2293 = sand.u32 %s142, 1
        %s2294 = scalar_lea.sflag [#allocation4], %s2293
        %s2295 = sand.u32 %s142, 1
        %s2296 = smul.addr %s2295, 16
        %s2297 = scalar_lea.vmem [#allocation10], %s2296
        // Predicated region
        $region57: #{tpu_custom_call.1} parent=39 // pred_check
          %p2298 = pneg %p152
        $region58: #{tpu_custom_call.1} parent=39 // pred_check_branch
          %2300 = sbr.rel (%p2298) target = $region60
        $region59: #{tpu_custom_call.1} parent=39 // pred_region
          %s2302 = ssub.s32 256, 256
          %2303 = vsyncadd %s2294, %s2302
          %s2304 = smul.addr %s24, 2
          %s2305 = smul.addr %s2304, 128
          %s2306 = scalar_lea.hbm %s5, %s2305
          %s2308 = sshll.u32 %s2297, 4
          %s2309 = int_to_ptr.vmem [resolvable:$true] %s2308
          %2311 = dma.vmem_to_hbm [thread:$0]  %s2309, 256, %s2306, %s2294
        $region60: #{tpu_custom_call.1} parent=39 // pred_fallthru
          _
      $region40: #{tpu_custom_call.1} parent=5 // pred_fallthru
        _
      %p2312 = scmp.le.s32.totalorder 2, %s19
      // Predicated region
      $region61: #{tpu_custom_call.1} parent=5 // pred_check
        %p2313 = pneg %p2312
      $region62: #{tpu_custom_call.1} parent=5 // pred_check_branch
        %2315 = sbr.rel (%p2313) target = $region64
      $region63: #{tpu_custom_call.1} parent=5 // pred_region
        %s2316 = ssub.s32 %s19, 2
        // Predicated region
        $region65: #{tpu_custom_call.1} parent=63 // pred_check
          %p2317 = pneg %p158
        $region66: #{tpu_custom_call.1} parent=63 // pred_check_branch
          %2319 = sbr.rel (%p2317) target = $region68
        $region67: #{tpu_custom_call.1} parent=63 // pred_region
          %s2320 = sand.u32 %s143, 1
          %s2321 = scalar_lea.sflag [#allocation4], %s2320
          %s2322 = sand.u32 %s143, 1
          %s2323 = smul.addr %s2322, 16
          %s2324 = scalar_lea.vmem [#allocation10], %s2323
          %2325 = dma.done %s2321, 256
        $region68: #{tpu_custom_call.1} parent=63 // pred_fallthru
          _
      $region64: #{tpu_custom_call.1} parent=5 // pred_fallthru
        _
    $region6: #{tpu_custom_call.1} parent=1 // loop_footer
      %s23 = sadd.s32 1, %s19
    $region7: #{tpu_custom_call.1} parent=1 // loop_footer_branch
      %18 = sbr.rel target = $region3
    $region8: #{tpu_custom_call.1} parent=1 // loop_exit
      _
    %2326 = vsyncpa [#allocation3], 1
    %s2327 = scalar_lea.sflag [#allocation3], 1
    %2328 = vsyncpa %s2327, 1
    %2329 = vsyncpa [#allocation6], 1
    %2330 = vsyncpa [#allocation9], 1
    %2331 = vsyncpa [#allocation4], 1
    %s2332 = scalar_lea.sflag [#allocation4], 1
    %2333 = vsyncpa %s2332, 1

</llo_original>
